<compile_context>
chip_gen: v7x
topology: tpu7x:2x2x1
jax: 0.10.0
libtpu: 0.0.40
codegen_flags: <defaults>
</compile_context>

<pallas_src>
import jax
import jax.numpy as jnp
from jax import lax
from jax.experimental import pallas as pl
from jax.experimental.pallas import tpu as pltpu


def _round_up(n, m):
    return ((n + m - 1) // m) * m


def _make_kernel(Bt, Ot, Gt, Lpp, SPl, SPr, NP, cdt, label_dt):
    """Bt sequences / Ot labels (in groups of Gt) per grid step."""

    def kernel(xf_ref, xb_ref, wtop_ref, wbot_ref, bcat_ref, wspan_ref,
               wlab_ref, s_span_ref, s_label_ref,
               slb_sc, spr_sc, t_sc, lab_sc, u_sc):
        oc = pl.program_id(1)

        def mlp_seg(lo, width):
            # fused 4-MLP segment: top/bottom halves of the hidden dim summed,
            # biaffine bias-1 columns baked into the weights.
            pre = (jnp.dot(xf_ref[...], wtop_ref[:, lo:lo + width],
                           preferred_element_type=jnp.float32)
                   + jnp.dot(xb_ref[...], wbot_ref[:, lo:lo + width],
                             preferred_element_type=jnp.float32)
                   + bcat_ref[:, lo:lo + width])
            return jnp.where(pre > 0, pre, 0.1 * pre).astype(cdt)  # LeakyReLU(.1)

        # ---- once per batch block: MLPs + span biaffine ---------------------
        @pl.when(oc == 0)
        def _():
            # per-segment scratch keeps vreg pressure bounded; lab_sc stays
            # resident across all label-chunk (oc) steps of this batch block.
            lab_sc[...] = mlp_seg(SPl + SPr, 2 * NP)   # label_l | label_r
            slb_sc[...] = mlp_seg(0, SPl)              # span_l (+ bias column)
            spr_sc[...] = mlp_seg(SPl, SPr)            # span_r
            t_sc[...] = jnp.dot(slb_sc[...], wspan_ref[...],
                                preferred_element_type=jnp.float32).astype(cdt)
            for bt in range(Bt):                       # Bt is small (1-4)
                r0 = bt * Lpp
                s_span_ref[bt] = lax.dot_general(      # NT matmul, no transpose
                    t_sc[r0:r0 + Lpp, :], spr_sc[r0:r0 + Lpp, :],
                    (((1,), (1,)), ((), ())),
                    preferred_element_type=jnp.float32)

        # ---- every step: Ot labels ------------------------------------------
        # 1) first contraction u[o] = label_l @ W[o], staged (seq, label, pos)
        #    row-major into u_sc so step 2 can fold labels into the matmul M.
        lab_l = lab_sc[:, :NP]
        for og in range(Ot // Gt):                     # Gt*NP-wide MXU matmuls
            u_g = jnp.dot(lab_l, wlab_ref[:, og * Gt * NP:(og + 1) * Gt * NP],
                          preferred_element_type=jnp.float32).astype(cdt)
            for g in range(Gt):
                ot = og * Gt + g
                for bt in range(Bt):
                    u_sc[(bt * Ot + ot) * Lpp:(bt * Ot + ot + 1) * Lpp, :] = \
                        u_g[bt * Lpp:(bt + 1) * Lpp, g * NP:(g + 1) * NP]
        # 2) second contraction: one NT matmul per sequence with M = Ot*Lpp;
        #    the [Ot*Lpp, Lpp] result splits for free into [Ot, Lpp, Lpp].
        for bt in range(Bt):
            r0 = bt * Lpp
            res = lax.dot_general(
                u_sc[bt * Ot * Lpp:(bt + 1) * Ot * Lpp, :],
                lab_sc[r0:r0 + Lpp, NP:],
                (((1,), (1,)), ((), ())),
                preferred_element_type=jnp.float32)
            s_label_ref[bt] = res.reshape(Ot, Lpp, Lpp).astype(label_dt)

    return kernel


def crf_constituency_decoder_forward(x, params, *, block_b=None,
                                     labels_per_step=None,
                                     compute_dtype=jnp.bfloat16,
                                     label_out_dtype=None,
                                     vmem_budget_bytes=40 << 20):
    """Pallas implementation of CRFConstituencyDecoder.forward.

    x: [B, L, H] encoder states.
    Returns s_span [B, L-1, L-1] (f32) and s_label [B, L-1, L-1, n_labels]
    (label_out_dtype; defaults to compute_dtype to halve HBM writeback).
    compute_dtype=jnp.float32 gives exact parity with the reference.
    """
    wsl, bsl, wsr, bsr, wll, bll, wlr, blr, wspan, wlabel = params
    B, L, H = x.shape
    assert H % 2 == 0 and L >= 2
    h = H // 2
    Lp = L - 1
    S = wsl.shape[1]
    Nl = wll.shape[1]
    O = wlabel.shape[0]

    f32 = jnp.float32
    cdt = jnp.dtype(compute_dtype)
    label_dt = jnp.dtype(cdt if label_out_dtype is None else label_out_dtype)

    LANE, SUB = 128, 8
    Lpp = _round_up(Lp, SUB)
    # lane-dense output stores are the biggest single lever: if Lp is within
    # ~1.5x of a full 128-lane tile, pad the span axes up to 128.
    if Lpp < LANE and 3 * Lp >= 2 * LANE:
        Lpp = LANE
    SPl = _round_up(S + 1, LANE)       # span_l segment (with bias-1 column)
    SPr = _round_up(S, LANE)           # span_r segment
    NP = _round_up(Nl + 1, LANE)       # label segments (with bias-1 column)
    Ncat = SPl + SPr + 2 * NP

    cb = cdt.itemsize
    lb = label_dt.itemsize

    def vmem_bytes(bt, ot):
        # double-buffered pipeline blocks + single-copy scratch.
        blocks = ((2 * bt * Lpp * h + 2 * h * Ncat + SPl * SPr + NP * ot * NP) * cb
                  + Ncat * 4 + bt * Lpp * Lpp * 4 + bt * ot * Lpp * Lpp * lb)
        scratch = (bt * Lpp * (SPl + 2 * SPr + 2 * NP) * cb
                   + bt * ot * Lpp * NP * cb)
        return 2 * blocks + scratch

    # ---- tiling: sequences per step ---------------------------------------
    if block_b is None:
        target = max(1, 512 // Lpp)                    # fill MXU rows
        divs = [d for d in range(1, B + 1) if B % d == 0 and d <= target]
        even = [d for d in divs if (B // d) % 2 == 0]  # v7x megacore balance
        multi = [d for d in divs if B // d >= 2]
        block_b = max(even or multi or divs)
    Bt = block_b
    assert B % Bt == 0

    # ---- tiling: labels per step (prefer divisors of O: no padded planes) --
    if labels_per_step is None:
        cap = min(O, 16)                               # bounds in-kernel unroll
        cands = sorted({d for d in range(1, cap + 1) if O % d == 0} | {cap},
                       reverse=True)
        labels_per_step = next((c for c in cands
                                if vmem_bytes(Bt, c) <= vmem_budget_bytes), 1)
    Ot = labels_per_step
    Opad = _round_up(O, Ot)
    Gt = 2 if Ot % 2 == 0 else 1                       # 2*NP-wide first matmul

    vmem_limit = int(min(100 << 20,
                         max(vmem_bytes(Bt, Ot) * 5 // 4 + (1 << 20), 32 << 20)))

    # ---- host-side preprocessing (cheap XLA ops) ---------------------------
    pad_rows = Lpp - Lp
    x_f = jnp.pad(x[:, :-1, :h], ((0, 0), (0, pad_rows), (0, 0)))
    x_b = jnp.pad(x[:, 1:, h:], ((0, 0), (0, pad_rows), (0, 0)))
    x_f = x_f.reshape(B * Lpp, h).astype(cdt)
    x_b = x_b.reshape(B * Lpp, h).astype(cdt)

    def seg(w, b, with_one, width):
        if with_one:                                   # bake bias column: W=0, b=1
            w = jnp.concatenate([w, jnp.zeros((H, 1), f32)], axis=1)
            b = jnp.concatenate([b, jnp.ones((1, 1), f32)], axis=1)
        w = jnp.pad(w, ((0, 0), (0, width - w.shape[1])))
        b = jnp.pad(b, ((0, 0), (0, width - b.shape[1])))
        return w, b

    segs = [seg(wsl, bsl, True, SPl), seg(wsr, bsr, False, SPr),
            seg(wll, bll, True, NP), seg(wlr, blr, True, NP)]
    Wcat = jnp.concatenate([s[0] for s in segs], axis=1)       # [H, Ncat]
    bcat = jnp.concatenate([s[1] for s in segs], axis=1).astype(f32)
    Wtop = Wcat[:h].astype(cdt)
    Wbot = Wcat[h:].astype(cdt)

    wspan_p = jnp.zeros((SPl, SPr), f32).at[:S + 1, :S].set(wspan).astype(cdt)
    wlab_p = jnp.zeros((Opad, NP, NP), f32).at[:O, :Nl + 1, :Nl + 1].set(wlabel)
    # flatten o-major along lanes: wlab_flat[k, o*NP + n] = W[o, k, n]
    wlab_flat = jnp.transpose(wlab_p, (1, 0, 2)).reshape(NP, Opad * NP).astype(cdt)

    kernel = _make_kernel(Bt, Ot, Gt, Lpp, SPl, SPr, NP, cdt, label_dt)

    # TODO(synk): on v7x (64 MiB VMEM) add pipeline_mode=pl.Buffered(1) to the
    # grid-constant weight specs (Wtop/Wbot/bcat/wspan) to single-buffer them.
    in_specs = [
        pl.BlockSpec((Bt * Lpp, h), lambda b, oc: (b, 0)),        # x_f (rows flat)
        pl.BlockSpec((Bt * Lpp, h), lambda b, oc: (b, 0)),        # x_b
        pl.BlockSpec((h, Ncat), lambda b, oc: (0, 0)),            # fused W (top)
        pl.BlockSpec((h, Ncat), lambda b, oc: (0, 0)),            # fused W (bottom)
        pl.BlockSpec((1, Ncat), lambda b, oc: (0, 0)),            # fused bias
        pl.BlockSpec((SPl, SPr), lambda b, oc: (0, 0)),           # span biaffine W
        pl.BlockSpec((NP, Ot * NP), lambda b, oc: (0, oc)),       # label W chunk
    ]
    out_specs = [
        pl.BlockSpec((Bt, Lpp, Lpp), lambda b, oc: (b, 0, 0)),          # s_span
        pl.BlockSpec((Bt, Ot, Lpp, Lpp), lambda b, oc: (b, oc, 0, 0)),  # s_label
    ]
    out_shape = (
        jax.ShapeDtypeStruct((B, Lpp, Lpp), f32),
        jax.ShapeDtypeStruct((B, Opad, Lpp, Lpp), label_dt),
    )
    scratch_shapes = [
        pltpu.VMEM((Bt * Lpp, SPl), cdt),      # span_l (+bias) activations
        pltpu.VMEM((Bt * Lpp, SPr), cdt),      # span_r activations
        pltpu.VMEM((Bt * Lpp, SPr), cdt),      # t = span_l_b @ W_span
        pltpu.VMEM((Bt * Lpp, 2 * NP), cdt),   # label_l | label_r activations
        pltpu.VMEM((Bt * Ot * Lpp, NP), cdt),  # staged u, (seq, label, pos) rows
    ]

    s_span_p, s_label_p = pl.pallas_call(
        kernel,
        grid=(B // Bt, Opad // Ot),
        in_specs=in_specs,
        out_specs=out_specs,
        out_shape=out_shape,
        scratch_shapes=scratch_shapes,
        compiler_params=pltpu.CompilerParams(
            dimension_semantics=("parallel", "arbitrary"),
            vmem_limit_bytes=vmem_limit),
    )(x_f, x_b, Wtop, Wbot, bcat, wspan_p, wlab_flat)

    # strip padding; the [B,O,Lp,Lp] -> [B,Lp,Lp,O] permute stays in the wrapper
    s_span = s_span_p[:, :Lp, :Lp]
    s_label = jnp.transpose(s_label_p[:, :O, :Lp, :Lp], (0, 2, 3, 1))
    return s_span, s_label


def _reference_forward(x, params):
    """Pure-JAX reference of the PyTorch forward (for validation)."""
    wsl, bsl, wsr, bsr, wll, bll, wlr, blr, wspan, wlabel = params
    h = x.shape[-1] // 2
    xc = jnp.concatenate([x[:, :-1, :h], x[:, 1:, h:]], axis=-1)
    lrelu = lambda v: jnp.where(v > 0, v, 0.1 * v)
    span_l = lrelu(xc @ wsl + bsl)
    span_r = lrelu(xc @ wsr + bsr)
    lab_l = lrelu(xc @ wll + bll)
    lab_r = lrelu(xc @ wlr + blr)
    ones = jnp.ones(span_l.shape[:-1] + (1,), jnp.float32)
    span_l_b = jnp.concatenate([span_l, ones], -1)
    s_span = jnp.einsum('bxi,ij,byj->bxy', span_l_b, wspan, span_r)
    lab_l_b = jnp.concatenate([lab_l, ones], -1)
    lab_r_b = jnp.concatenate([lab_r, ones], -1)
    s_label = jnp.einsum('bxi,oij,byj->bxyo', lab_l_b, wlabel, lab_r_b)
    return s_span, s_label


if __name__ == "__main__":
    # small synthetic config
    B, L, H = 2, 9, 32          # batch, seq_len, encoder hidden size
    S, Nl, O = 32, 16, 8        # n_mlp_span, n_mlp_label, n_labels

    key = jax.random.PRNGKey(0)
    ks = jax.random.split(key, 12)
    x = jax.random.normal(ks[0], (B, L, H), jnp.float32)

    params = (
        0.1 * jax.random.normal(ks[1], (H, S), jnp.float32),            # W span_l
        0.1 * jax.random.normal(ks[2], (1, S), jnp.float32),            # b span_l
        0.1 * jax.random.normal(ks[3], (H, S), jnp.float32),            # W span_r
        0.1 * jax.random.normal(ks[4], (1, S), jnp.float32),            # b span_r
        0.1 * jax.random.normal(ks[5], (H, Nl), jnp.float32),           # W label_l
        0.1 * jax.random.normal(ks[6], (1, Nl), jnp.float32),           # b label_l
        0.1 * jax.random.normal(ks[7], (H, Nl), jnp.float32),           # W label_r
        0.1 * jax.random.normal(ks[8], (1, Nl), jnp.float32),           # b label_r
        0.1 * jax.random.normal(ks[9], (S + 1, S), jnp.float32),        # span biaffine
        0.1 * jax.random.normal(ks[10], (O, Nl + 1, Nl + 1), jnp.float32),  # label biaffine
    )

    ref_span, ref_label = _reference_forward(x, params)

    # exact-parity run (f32 compute / f32 outputs)
    s_span32, s_label32 = crf_constituency_decoder_forward(
        x, params, compute_dtype=jnp.float32, label_out_dtype=jnp.float32)
    jax.block_until_ready((s_span32, s_label32))
    assert s_span32.shape == (B, L - 1, L - 1)
    assert s_label32.shape == (B, L - 1, L - 1, O)
    assert jnp.allclose(s_span32, ref_span, atol=1e-4, rtol=1e-4)
    assert jnp.allclose(s_label32, ref_label, atol=1e-4, rtol=1e-4)

    # default fast path (bf16 compute, bf16 s_label writeback)
    s_span_bf, s_label_bf = crf_constituency_decoder_forward(x, params)
    jax.block_until_ready((s_span_bf, s_label_bf))
    assert jnp.allclose(s_span_bf.astype(jnp.float32), ref_span,
                        atol=2e-1, rtol=5e-2)
    assert jnp.allclose(s_label_bf.astype(jnp.float32), ref_label,
                        atol=2e-1, rtol=5e-2)

    print("KERNEL_OK")
</pallas_src>

<mosaic_0001>
module attributes {stable_mosaic.version = 11 : i64} {
  func.func @kernel(%arg0: i32, %arg1: i32, %arg2: memref<8x16xf32, #tpu.memory_space<vmem>>, %arg3: memref<8x16xf32, #tpu.memory_space<vmem>>, %arg4: memref<16x512xf32, #tpu.memory_space<vmem>>, %arg5: memref<16x512xf32, #tpu.memory_space<vmem>>, %arg6: memref<1x512xf32, #tpu.memory_space<vmem>>, %arg7: memref<128x128xf32, #tpu.memory_space<vmem>>, %arg8: memref<128x1024xf32, #tpu.memory_space<vmem>>, %arg9: memref<1x8x8xf32, #tpu.memory_space<vmem>>, %arg10: memref<1x8x8x8xf32, #tpu.memory_space<vmem>>, %arg11: memref<8x128xf32, #tpu.memory_space<vmem>>, %arg12: memref<8x128xf32, #tpu.memory_space<vmem>>, %arg13: memref<8x128xf32, #tpu.memory_space<vmem>>, %arg14: memref<8x256xf32, #tpu.memory_space<vmem>>, %arg15: memref<64x128xf32, #tpu.memory_space<vmem>>) attributes {dimension_semantics = [#tpu.dimension_semantics<parallel>, #tpu.dimension_semantics<arbitrary>], iteration_bounds = array<i64: 2, 1>, scalar_prefetch = 0 : i64, scratch_operands = 5 : i64, tpu.core_type = #tpu.core_type<tc>, window_params = [{transform_indices = @transform_0, window_bounds = array<i64: 8, 16>}, {transform_indices = @transform_1, window_bounds = array<i64: 8, 16>}, {pipeline_mode = #tpu.pipeline_mode<synchronous>, transform_indices = @transform_2, window_bounds = array<i64: 16, 512>}, {pipeline_mode = #tpu.pipeline_mode<synchronous>, transform_indices = @transform_3, window_bounds = array<i64: 16, 512>}, {pipeline_mode = #tpu.pipeline_mode<synchronous>, transform_indices = @transform_4, window_bounds = array<i64: 1, 512>}, {pipeline_mode = #tpu.pipeline_mode<synchronous>, transform_indices = @transform_5, window_bounds = array<i64: 128, 128>}, {transform_indices = @transform_6, window_bounds = array<i64: 128, 1024>}, {transform_indices = @transform_7, window_bounds = array<i64: 1, 8, 8>}, {transform_indices = @transform_8, window_bounds = array<i64: 1, 8, 8, 8>}]} {
    %c0_i32 = arith.constant 0 : i32
    %0 = arith.cmpi eq, %arg1, %c0_i32 : i32
    %1 = arith.extui %0 : i1 to i32
    %c0_i32_0 = arith.constant 0 : i32
    %2 = arith.cmpi ne, %1, %c0_i32_0 : i32
    scf.if %2 {
      %c0_27 = arith.constant 0 : index
      %c0_28 = arith.constant 0 : index
      %35 = vector.load %arg2[%c0_27, %c0_28] : memref<8x16xf32, #tpu.memory_space<vmem>>, vector<8x16xf32>
      %c0_29 = arith.constant 0 : index
      %c256_30 = arith.constant 256 : index
      %36 = vector.load %arg4[%c0_29, %c256_30] : memref<16x512xf32, #tpu.memory_space<vmem>>, vector<16x256xf32>
      %cst_31 = arith.constant dense<0.000000e+00> : vector<8x256xf32>
      %37 = tpu.matmul %35, %36, %cst_31 {dimension_numbers = #tpu.dot_dimension_numbers<[1], [0], [0], [1], [0, 0, 1, 1], [], []>} : vector<8x16xf32>, vector<16x256xf32>, vector<8x256xf32> -> vector<8x256xf32>
      %c0_32 = arith.constant 0 : index
      %c0_33 = arith.constant 0 : index
      %38 = vector.load %arg3[%c0_32, %c0_33] : memref<8x16xf32, #tpu.memory_space<vmem>>, vector<8x16xf32>
      %c0_34 = arith.constant 0 : index
      %c256_35 = arith.constant 256 : index
      %39 = vector.load %arg5[%c0_34, %c256_35] : memref<16x512xf32, #tpu.memory_space<vmem>>, vector<16x256xf32>
      %cst_36 = arith.constant dense<0.000000e+00> : vector<8x256xf32>
      %40 = tpu.matmul %38, %39, %cst_36 {dimension_numbers = #tpu.dot_dimension_numbers<[1], [0], [0], [1], [0, 0, 1, 1], [], []>} : vector<8x16xf32>, vector<16x256xf32>, vector<8x256xf32> -> vector<8x256xf32>
      %41 = arith.addf %37, %40 : vector<8x256xf32>
      %c0_37 = arith.constant 0 : index
      %c256_38 = arith.constant 256 : index
      %42 = vector.load %arg6[%c0_37, %c256_38] : memref<1x512xf32, #tpu.memory_space<vmem>>, vector<1x256xf32>
      %43 = vector.broadcast %42 : vector<1x256xf32> to vector<8x256xf32>
      %44 = arith.addf %41, %43 : vector<8x256xf32>
      %cst_39 = arith.constant 0.000000e+00 : f32
      %45 = vector.broadcast %cst_39 : f32 to vector<8x256xf32>
      %46 = arith.cmpf ogt, %44, %45 : vector<8x256xf32>
      %cst_40 = arith.constant 1.000000e-01 : f32
      %47 = vector.broadcast %cst_40 : f32 to vector<8x256xf32>
      %48 = arith.mulf %47, %44 : vector<8x256xf32>
      %49 = arith.select %46, %44, %48 : vector<8x256xi1>, vector<8x256xf32>
      %c0_41 = arith.constant 0 : index
      %c0_42 = arith.constant 0 : index
      %50 = vector.load %arg14[%c0_41, %c0_42] : memref<8x256xf32, #tpu.memory_space<vmem>>, vector<8x256xf32>
      tpu.vector_store %arg14[%c0_41, %c0_42], %49 {strides = array<i32>} : memref<8x256xf32, #tpu.memory_space<vmem>>, vector<8x256xf32>,
      %c0_43 = arith.constant 0 : index
      %c0_44 = arith.constant 0 : index
      %51 = vector.load %arg2[%c0_43, %c0_44] : memref<8x16xf32, #tpu.memory_space<vmem>>, vector<8x16xf32>
      %c0_45 = arith.constant 0 : index
      %c0_46 = arith.constant 0 : index
      %52 = vector.load %arg4[%c0_45, %c0_46] : memref<16x512xf32, #tpu.memory_space<vmem>>, vector<16x128xf32>
      %cst_47 = arith.constant dense<0.000000e+00> : vector<8x128xf32>
      %53 = tpu.matmul %51, %52, %cst_47 {dimension_numbers = #tpu.dot_dimension_numbers<[1], [0], [0], [1], [0, 0, 1, 1], [], []>} : vector<8x16xf32>, vector<16x128xf32>, vector<8x128xf32> -> vector<8x128xf32>
      %c0_48 = arith.constant 0 : index
      %c0_49 = arith.constant 0 : index
      %54 = vector.load %arg3[%c0_48, %c0_49] : memref<8x16xf32, #tpu.memory_space<vmem>>, vector<8x16xf32>
      %c0_50 = arith.constant 0 : index
      %c0_51 = arith.constant 0 : index
      %55 = vector.load %arg5[%c0_50, %c0_51] : memref<16x512xf32, #tpu.memory_space<vmem>>, vector<16x128xf32>
      %cst_52 = arith.constant dense<0.000000e+00> : vector<8x128xf32>
      %56 = tpu.matmul %54, %55, %cst_52 {dimension_numbers = #tpu.dot_dimension_numbers<[1], [0], [0], [1], [0, 0, 1, 1], [], []>} : vector<8x16xf32>, vector<16x128xf32>, vector<8x128xf32> -> vector<8x128xf32>
      %57 = arith.addf %53, %56 : vector<8x128xf32>
      %c0_53 = arith.constant 0 : index
      %c0_54 = arith.constant 0 : index
      %58 = vector.load %arg6[%c0_53, %c0_54] : memref<1x512xf32, #tpu.memory_space<vmem>>, vector<1x128xf32>
      %59 = vector.broadcast %58 : vector<1x128xf32> to vector<8x128xf32>
      %60 = arith.addf %57, %59 : vector<8x128xf32>
      %cst_55 = arith.constant 0.000000e+00 : f32
      %61 = vector.broadcast %cst_55 : f32 to vector<8x128xf32>
      %62 = arith.cmpf ogt, %60, %61 : vector<8x128xf32>
      %cst_56 = arith.constant 1.000000e-01 : f32
      %63 = vector.broadcast %cst_56 : f32 to vector<8x128xf32>
      %64 = arith.mulf %63, %60 : vector<8x128xf32>
      %65 = arith.select %62, %60, %64 : vector<8x128xi1>, vector<8x128xf32>
      %c0_57 = arith.constant 0 : index
      %c0_58 = arith.constant 0 : index
      %66 = vector.load %arg11[%c0_57, %c0_58] : memref<8x128xf32, #tpu.memory_space<vmem>>, vector<8x128xf32>
      tpu.vector_store %arg11[%c0_57, %c0_58], %65 {strides = array<i32>} : memref<8x128xf32, #tpu.memory_space<vmem>>, vector<8x128xf32>,
      %c0_59 = arith.constant 0 : index
      %c0_60 = arith.constant 0 : index
      %67 = vector.load %arg2[%c0_59, %c0_60] : memref<8x16xf32, #tpu.memory_space<vmem>>, vector<8x16xf32>
      %c0_61 = arith.constant 0 : index
      %c128_62 = arith.constant 128 : index
      %68 = vector.load %arg4[%c0_61, %c128_62] : memref<16x512xf32, #tpu.memory_space<vmem>>, vector<16x128xf32>
      %cst_63 = arith.constant dense<0.000000e+00> : vector<8x128xf32>
      %69 = tpu.matmul %67, %68, %cst_63 {dimension_numbers = #tpu.dot_dimension_numbers<[1], [0], [0], [1], [0, 0, 1, 1], [], []>} : vector<8x16xf32>, vector<16x128xf32>, vector<8x128xf32> -> vector<8x128xf32>
      %c0_64 = arith.constant 0 : index
      %c0_65 = arith.constant 0 : index
      %70 = vector.load %arg3[%c0_64, %c0_65] : memref<8x16xf32, #tpu.memory_space<vmem>>, vector<8x16xf32>
      %c0_66 = arith.constant 0 : index
      %c128_67 = arith.constant 128 : index
      %71 = vector.load %arg5[%c0_66, %c128_67] : memref<16x512xf32, #tpu.memory_space<vmem>>, vector<16x128xf32>
      %cst_68 = arith.constant dense<0.000000e+00> : vector<8x128xf32>
      %72 = tpu.matmul %70, %71, %cst_68 {dimension_numbers = #tpu.dot_dimension_numbers<[1], [0], [0], [1], [0, 0, 1, 1], [], []>} : vector<8x16xf32>, vector<16x128xf32>, vector<8x128xf32> -> vector<8x128xf32>
      %73 = arith.addf %69, %72 : vector<8x128xf32>
      %c0_69 = arith.constant 0 : index
      %c128_70 = arith.constant 128 : index
      %74 = vector.load %arg6[%c0_69, %c128_70] : memref<1x512xf32, #tpu.memory_space<vmem>>, vector<1x128xf32>
      %75 = vector.broadcast %74 : vector<1x128xf32> to vector<8x128xf32>
      %76 = arith.addf %73, %75 : vector<8x128xf32>
      %cst_71 = arith.constant 0.000000e+00 : f32
      %77 = vector.broadcast %cst_71 : f32 to vector<8x128xf32>
      %78 = arith.cmpf ogt, %76, %77 : vector<8x128xf32>
      %cst_72 = arith.constant 1.000000e-01 : f32
      %79 = vector.broadcast %cst_72 : f32 to vector<8x128xf32>
      %80 = arith.mulf %79, %76 : vector<8x128xf32>
      %81 = arith.select %78, %76, %80 : vector<8x128xi1>, vector<8x128xf32>
      %c0_73 = arith.constant 0 : index
      %c0_74 = arith.constant 0 : index
      %82 = vector.load %arg12[%c0_73, %c0_74] : memref<8x128xf32, #tpu.memory_space<vmem>>, vector<8x128xf32>
      tpu.vector_store %arg12[%c0_73, %c0_74], %81 {strides = array<i32>} : memref<8x128xf32, #tpu.memory_space<vmem>>, vector<8x128xf32>,
      %c0_75 = arith.constant 0 : index
      %c0_76 = arith.constant 0 : index
      %83 = vector.load %arg11[%c0_75, %c0_76] : memref<8x128xf32, #tpu.memory_space<vmem>>, vector<8x128xf32>
      %c0_77 = arith.constant 0 : index
      %c0_78 = arith.constant 0 : index
      %84 = vector.load %arg7[%c0_77, %c0_78] : memref<128x128xf32, #tpu.memory_space<vmem>>, vector<128x128xf32>
      %cst_79 = arith.constant dense<0.000000e+00> : vector<8x128xf32>
      %85 = tpu.matmul %83, %84, %cst_79 {dimension_numbers = #tpu.dot_dimension_numbers<[1], [0], [0], [1], [0, 0, 1, 1], [], []>} : vector<8x128xf32>, vector<128x128xf32>, vector<8x128xf32> -> vector<8x128xf32>
      %c0_80 = arith.constant 0 : index
      %c0_81 = arith.constant 0 : index
      %86 = vector.load %arg13[%c0_80, %c0_81] : memref<8x128xf32, #tpu.memory_space<vmem>>, vector<8x128xf32>
      tpu.vector_store %arg13[%c0_80, %c0_81], %85 {strides = array<i32>} : memref<8x128xf32, #tpu.memory_space<vmem>>, vector<8x128xf32>,
      %c0_82 = arith.constant 0 : index
      %c0_83 = arith.constant 0 : index
      %87 = vector.load %arg13[%c0_82, %c0_83] : memref<8x128xf32, #tpu.memory_space<vmem>>, vector<8x128xf32>
      %c0_84 = arith.constant 0 : index
      %c0_85 = arith.constant 0 : index
      %88 = vector.load %arg12[%c0_84, %c0_85] : memref<8x128xf32, #tpu.memory_space<vmem>>, vector<8x128xf32>
      %cst_86 = arith.constant dense<0.000000e+00> : vector<8x8xf32>
      %89 = tpu.matmul %87, %88, %cst_86 {dimension_numbers = #tpu.dot_dimension_numbers<[1], [1], [0], [0], [0, 0, 1, 0], [], []>} : vector<8x128xf32>, vector<8x128xf32>, vector<8x8xf32> -> vector<8x8xf32>
      %c0_87 = arith.constant 0 : index
      %c0_88 = arith.constant 0 : index
      %c0_89 = arith.constant 0 : index
      %90 = vector.load %arg9[%c0_87, %c0_88, %c0_89] : memref<1x8x8xf32, #tpu.memory_space<vmem>>, vector<1x8x8xf32>
      %91 = vector.shape_cast %90 : vector<1x8x8xf32> to vector<8x8xf32>
      %92 = vector.shape_cast %89 : vector<8x8xf32> to vector<1x8x8xf32>
      tpu.vector_store %arg9[%c0_87, %c0_88, %c0_89], %92 {strides = array<i32>} : memref<1x8x8xf32, #tpu.memory_space<vmem>>, vector<1x8x8xf32>,
    } else {
    }
    %c0 = arith.constant 0 : index
    %c0_1 = arith.constant 0 : index
    %3 = vector.load %arg14[%c0, %c0_1] : memref<8x256xf32, #tpu.memory_space<vmem>>, vector<8x128xf32>
    %c0_2 = arith.constant 0 : index
    %c0_3 = arith.constant 0 : index
    %4 = vector.load %arg8[%c0_2, %c0_3] : memref<128x1024xf32, #tpu.memory_space<vmem>>, vector<128x256xf32>
    %cst = arith.constant dense<0.000000e+00> : vector<8x256xf32>
    %5 = tpu.matmul %3, %4, %cst {dimension_numbers = #tpu.dot_dimension_numbers<[1], [0], [0], [1], [0, 0, 1, 1], [], []>} : vector<8x128xf32>, vector<128x256xf32>, vector<8x256xf32> -> vector<8x256xf32>
    %6 = vector.extract_strided_slice %5 {offsets = [0, 0], sizes = [8, 128], strides = [1, 1]} : vector<8x256xf32> to vector<8x128xf32>
    %c0_4 = arith.constant 0 : index
    %c0_5 = arith.constant 0 : index
    %7 = vector.load %arg15[%c0_4, %c0_5] : memref<64x128xf32, #tpu.memory_space<vmem>>, vector<8x128xf32>
    tpu.vector_store %arg15[%c0_4, %c0_5], %6 {strides = array<i32>} : memref<64x128xf32, #tpu.memory_space<vmem>>, vector<8x128xf32>,
    %8 = vector.extract_strided_slice %5 {offsets = [0, 128], sizes = [8, 128], strides = [1, 1]} : vector<8x256xf32> to vector<8x128xf32>
    %c8 = arith.constant 8 : index
    %c0_6 = arith.constant 0 : index
    %9 = vector.load %arg15[%c8, %c0_6] : memref<64x128xf32, #tpu.memory_space<vmem>>, vector<8x128xf32>
    tpu.vector_store %arg15[%c8, %c0_6], %8 {strides = array<i32>} : memref<64x128xf32, #tpu.memory_space<vmem>>, vector<8x128xf32>,
    %c0_7 = arith.constant 0 : index
    %c256 = arith.constant 256 : index
    %10 = vector.load %arg8[%c0_7, %c256] : memref<128x1024xf32, #tpu.memory_space<vmem>>, vector<128x256xf32>
    %cst_8 = arith.constant dense<0.000000e+00> : vector<8x256xf32>
    %11 = tpu.matmul %3, %10, %cst_8 {dimension_numbers = #tpu.dot_dimension_numbers<[1], [0], [0], [1], [0, 0, 1, 1], [], []>} : vector<8x128xf32>, vector<128x256xf32>, vector<8x256xf32> -> vector<8x256xf32>
    %12 = vector.extract_strided_slice %11 {offsets = [0, 0], sizes = [8, 128], strides = [1, 1]} : vector<8x256xf32> to vector<8x128xf32>
    %c16 = arith.constant 16 : index
    %c0_9 = arith.constant 0 : index
    %13 = vector.load %arg15[%c16, %c0_9] : memref<64x128xf32, #tpu.memory_space<vmem>>, vector<8x128xf32>
    tpu.vector_store %arg15[%c16, %c0_9], %12 {strides = array<i32>} : memref<64x128xf32, #tpu.memory_space<vmem>>, vector<8x128xf32>,
    %14 = vector.extract_strided_slice %11 {offsets = [0, 128], sizes = [8, 128], strides = [1, 1]} : vector<8x256xf32> to vector<8x128xf32>
    %c24 = arith.constant 24 : index
    %c0_10 = arith.constant 0 : index
    %15 = vector.load %arg15[%c24, %c0_10] : memref<64x128xf32, #tpu.memory_space<vmem>>, vector<8x128xf32>
    tpu.vector_store %arg15[%c24, %c0_10], %14 {strides = array<i32>} : memref<64x128xf32, #tpu.memory_space<vmem>>, vector<8x128xf32>,
    %c0_11 = arith.constant 0 : index
    %c512 = arith.constant 512 : index
    %16 = vector.load %arg8[%c0_11, %c512] : memref<128x1024xf32, #tpu.memory_space<vmem>>, vector<128x256xf32>
    %cst_12 = arith.constant dense<0.000000e+00> : vector<8x256xf32>
    %17 = tpu.matmul %3, %16, %cst_12 {dimension_numbers = #tpu.dot_dimension_numbers<[1], [0], [0], [1], [0, 0, 1, 1], [], []>} : vector<8x128xf32>, vector<128x256xf32>, vector<8x256xf32> -> vector<8x256xf32>
    %18 = vector.extract_strided_slice %17 {offsets = [0, 0], sizes = [8, 128], strides = [1, 1]} : vector<8x256xf32> to vector<8x128xf32>
    %c32 = arith.constant 32 : index
    %c0_13 = arith.constant 0 : index
    %19 = vector.load %arg15[%c32, %c0_13] : memref<64x128xf32, #tpu.memory_space<vmem>>, vector<8x128xf32>
    tpu.vector_store %arg15[%c32, %c0_13], %18 {strides = array<i32>} : memref<64x128xf32, #tpu.memory_space<vmem>>, vector<8x128xf32>,
    %20 = vector.extract_strided_slice %17 {offsets = [0, 128], sizes = [8, 128], strides = [1, 1]} : vector<8x256xf32> to vector<8x128xf32>
    %c40 = arith.constant 40 : index
    %c0_14 = arith.constant 0 : index
    %21 = vector.load %arg15[%c40, %c0_14] : memref<64x128xf32, #tpu.memory_space<vmem>>, vector<8x128xf32>
    tpu.vector_store %arg15[%c40, %c0_14], %20 {strides = array<i32>} : memref<64x128xf32, #tpu.memory_space<vmem>>, vector<8x128xf32>,
    %c0_15 = arith.constant 0 : index
    %c768 = arith.constant 768 : index
    %22 = vector.load %arg8[%c0_15, %c768] : memref<128x1024xf32, #tpu.memory_space<vmem>>, vector<128x256xf32>
    %cst_16 = arith.constant dense<0.000000e+00> : vector<8x256xf32>
    %23 = tpu.matmul %3, %22, %cst_16 {dimension_numbers = #tpu.dot_dimension_numbers<[1], [0], [0], [1], [0, 0, 1, 1], [], []>} : vector<8x128xf32>, vector<128x256xf32>, vector<8x256xf32> -> vector<8x256xf32>
    %24 = vector.extract_strided_slice %23 {offsets = [0, 0], sizes = [8, 128], strides = [1, 1]} : vector<8x256xf32> to vector<8x128xf32>
    %c48 = arith.constant 48 : index
    %c0_17 = arith.constant 0 : index
    %25 = vector.load %arg15[%c48, %c0_17] : memref<64x128xf32, #tpu.memory_space<vmem>>, vector<8x128xf32>
    tpu.vector_store %arg15[%c48, %c0_17], %24 {strides = array<i32>} : memref<64x128xf32, #tpu.memory_space<vmem>>, vector<8x128xf32>,
    %26 = vector.extract_strided_slice %23 {offsets = [0, 128], sizes = [8, 128], strides = [1, 1]} : vector<8x256xf32> to vector<8x128xf32>
    %c56 = arith.constant 56 : index
    %c0_18 = arith.constant 0 : index
    %27 = vector.load %arg15[%c56, %c0_18] : memref<64x128xf32, #tpu.memory_space<vmem>>, vector<8x128xf32>
    tpu.vector_store %arg15[%c56, %c0_18], %26 {strides = array<i32>} : memref<64x128xf32, #tpu.memory_space<vmem>>, vector<8x128xf32>,
    %c0_19 = arith.constant 0 : index
    %c0_20 = arith.constant 0 : index
    %28 = vector.load %arg15[%c0_19, %c0_20] : memref<64x128xf32, #tpu.memory_space<vmem>>, vector<64x128xf32>
    %c0_21 = arith.constant 0 : index
    %c128 = arith.constant 128 : index
    %29 = vector.load %arg14[%c0_21, %c128] : memref<8x256xf32, #tpu.memory_space<vmem>>, vector<8x128xf32>
    %cst_22 = arith.constant dense<0.000000e+00> : vector<64x8xf32>
    %30 = tpu.matmul %28, %29, %cst_22 {dimension_numbers = #tpu.dot_dimension_numbers<[1], [1], [0], [0], [0, 0, 1, 0], [], []>} : vector<64x128xf32>, vector<8x128xf32>, vector<64x8xf32> -> vector<64x8xf32>
    %31 = vector.shape_cast %30 : vector<64x8xf32> to vector<8x8x8xf32>
    %c0_23 = arith.constant 0 : index
    %c0_24 = arith.constant 0 : index
    %c0_25 = arith.constant 0 : index
    %c0_26 = arith.constant 0 : index
    %32 = vector.load %arg10[%c0_23, %c0_24, %c0_25, %c0_26] : memref<1x8x8x8xf32, #tpu.memory_space<vmem>>, vector<1x8x8x8xf32>
    %33 = vector.shape_cast %32 : vector<1x8x8x8xf32> to vector<8x8x8xf32>
    %34 = vector.shape_cast %31 : vector<8x8x8xf32> to vector<1x8x8x8xf32>
    tpu.vector_store %arg10[%c0_23, %c0_24, %c0_25, %c0_26], %34 {strides = array<i32>} : memref<1x8x8x8xf32, #tpu.memory_space<vmem>>, vector<1x8x8x8xf32>,
    return
  }
  func.func @transform_0(%arg0: i32, %arg1: i32) -> (i32, i32) {
    %c0_i32 = arith.constant 0 : i32
    %c0_i32_0 = arith.constant 0 : i32
    return %arg0, %c0_i32 : i32, i32
  }
  func.func @transform_1(%arg0: i32, %arg1: i32) -> (i32, i32) {
    %c0_i32 = arith.constant 0 : i32
    %c0_i32_0 = arith.constant 0 : i32
    return %arg0, %c0_i32 : i32, i32
  }
  func.func @transform_2(%arg0: i32, %arg1: i32) -> (i32, i32) {
    %c0_i32 = arith.constant 0 : i32
    %c0_i32_0 = arith.constant 0 : i32
    %c0_i32_1 = arith.constant 0 : i32
    return %c0_i32, %c0_i32_0 : i32, i32
  }
  func.func @transform_3(%arg0: i32, %arg1: i32) -> (i32, i32) {
    %c0_i32 = arith.constant 0 : i32
    %c0_i32_0 = arith.constant 0 : i32
    %c0_i32_1 = arith.constant 0 : i32
    return %c0_i32, %c0_i32_0 : i32, i32
  }
  func.func @transform_4(%arg0: i32, %arg1: i32) -> (i32, i32) {
    %c0_i32 = arith.constant 0 : i32
    %c0_i32_0 = arith.constant 0 : i32
    %c0_i32_1 = arith.constant 0 : i32
    return %c0_i32, %c0_i32_0 : i32, i32
  }
  func.func @transform_5(%arg0: i32, %arg1: i32) -> (i32, i32) {
    %c0_i32 = arith.constant 0 : i32
    %c0_i32_0 = arith.constant 0 : i32
    %c0_i32_1 = arith.constant 0 : i32
    return %c0_i32, %c0_i32_0 : i32, i32
  }
  func.func @transform_6(%arg0: i32, %arg1: i32) -> (i32, i32) {
    %c0_i32 = arith.constant 0 : i32
    %c0_i32_0 = arith.constant 0 : i32
    return %c0_i32, %arg1 : i32, i32
  }
  func.func @transform_7(%arg0: i32, %arg1: i32) -> (i32, i32, i32) {
    %c0_i32 = arith.constant 0 : i32
    %c0_i32_0 = arith.constant 0 : i32
    %c0_i32_1 = arith.constant 0 : i32
    return %arg0, %c0_i32, %c0_i32_0 : i32, i32, i32
  }
  func.func @transform_8(%arg0: i32, %arg1: i32) -> (i32, i32, i32, i32) {
    %c0_i32 = arith.constant 0 : i32
    %c0_i32_0 = arith.constant 0 : i32
    %c0_i32_1 = arith.constant 0 : i32
    return %arg0, %arg1, %c0_i32, %c0_i32_0 : i32, i32, i32, i32
  }
}

</mosaic_0001>

<llo_original>
// kernel: tpu_custom_call.1
$region0: #{tpu_custom_call.1}
  #allocation0 [shape = 'u32[]', space=smem, size = 0x4, offset = 0x4, fixed_abs, tag = 'smem constant byte address 0x4 - core index']
  #allocation1 [shape = 'u32[144,128]{1,0:T(1,128)}', space=vmem, size = 0x12000, scoped, tag = 'internal scratch']
  #allocation2 [shape = 'f32[8,128]{1,0:T(8,128)}', space=vmem, size = 0x1000, scoped, tag = 'scratch operand']
  #allocation3 [shape = 'f32[8,128]{1,0:T(8,128)}', space=vmem, size = 0x1000, scoped, tag = 'scratch operand']
  #allocation4 [shape = 'f32[8,128]{1,0:T(8,128)}', space=vmem, size = 0x1000, scoped, tag = 'scratch operand']
  #allocation5 [shape = 'f32[8,256]{1,0:T(8,128)}', space=vmem, size = 0x2000, scoped, tag = 'scratch operand']
  #allocation6 [shape = 'f32[64,128]{1,0:T(8,128)}', space=vmem, size = 0x8000, scoped, tag = 'scratch operand']
  %s0 = inlined_call_operand.hbm [shape: f32[16,16], index: 0, kind: input, shape index: {}]
  %s1 = inlined_call_operand.hbm [shape: f32[16,16], index: 1, kind: input, shape index: {}]
  %s2 = inlined_call_operand.hbm [shape: f32[16,512], index: 2, kind: input, shape index: {}]
  %s3 = inlined_call_operand.hbm [shape: f32[16,512], index: 3, kind: input, shape index: {}]
  %s4 = inlined_call_operand.vmem [shape: f32[1,512], index: 4, kind: input, shape index: {}]
  %s5 = inlined_call_operand.hbm [shape: f32[128,128], index: 5, kind: input, shape index: {}]
  %s6 = inlined_call_operand.hbm [shape: f32[128,1024], index: 6, kind: input, shape index: {}]
  %s7 = inlined_call_operand.hbm [shape: f32[2,8,8], index: 7, kind: output, shape index: {0}]
  %s8 = inlined_call_operand.hbm [shape: f32[2,8,8,8], index: 8, kind: output, shape index: {1}]
  %9 = xla_tuple %s7, %s8
  %s10 = sld [smem:[#allocation0]]
  $region97: #{tpu_custom_call.1} parent=0
    _
  %s12 = ssub.s32 1, %s10
  %s13 = scalar_select 0, %s12, %s10
  $region1: #{tpu_custom_call.1} parent=0
    #allocation7 [shape = 'u8[8192]{0}', space=vmem, size = 0x2000, scoped, tag = 'input window, operand 0']
    #allocation8 [shape = 's32[2]{0}', space=sflag, size = 0x8, scoped, tag = 'scoped memory for tpu_custom_call.1']
    #allocation9 [shape = 's32[2]{0}', space=sflag, size = 0x8, scoped, tag = 'scoped memory for tpu_custom_call.1']
    #allocation10 [shape = 'u8[8192]{0}', space=vmem, size = 0x2000, scoped, tag = 'input window, operand 1']
    #allocation11 [shape = 's32[2]{0}', space=sflag, size = 0x8, scoped, tag = 'scoped memory for tpu_custom_call.1']
    #allocation12 [shape = 'u8[32768]{0}', space=vmem, size = 0x8000, scoped, tag = 'input window, operand 2, single buffered']
    #allocation13 [shape = 'u8[32768]{0}', space=vmem, size = 0x8000, scoped, tag = 'input window, operand 3, single buffered']
    #allocation14 [shape = 's32[1]{0}', space=sflag, size = 0x4, scoped, tag = 'scoped memory for tpu_custom_call.1']
    #allocation15 [shape = 'u8[65536]{0}', space=vmem, size = 0x10000, scoped, tag = 'input window, operand 5, single buffered']
    #allocation16 [shape = 'u8[524288]{0}', space=vmem, size = 0x80000, scoped, tag = 'input window, operand 6, single buffered']
    #allocation17 [shape = 's32[1]{0}', space=sflag, size = 0x4, scoped, tag = 'scoped memory for tpu_custom_call.1']
    #allocation18 [shape = 'u8[8192]{0}', space=vmem, size = 0x2000, scoped, tag = 'output window, operand 0']
    #allocation19 [shape = 'u8[65536]{0}', space=vmem, size = 0x10000, scoped, tag = 'output window, operand 1']
    #allocation20 [shape = 's32[2]{0}', space=sflag, size = 0x8, scoped, tag = 'scoped memory for tpu_custom_call.1']
    %14 = vsyncpa [#allocation8], 0
    %s15 = scalar_lea.sflag [#allocation8], 1
    %16 = vsyncpa %s15, 0
    %17 = vsyncpa [#allocation11], 0
    %s18 = scalar_lea.sflag [#allocation11], 1
    %19 = vsyncpa %s18, 0
    %20 = vsyncpa [#allocation14], 0
    %21 = vsyncpa [#allocation17], 0
    %22 = vsyncpa [#allocation9], 0
    %s23 = scalar_lea.sflag [#allocation9], 1
    %24 = vsyncpa %s23, 0
    %25 = vsyncpa [#allocation20], 0
    %s26 = scalar_lea.sflag [#allocation20], 1
    %27 = vsyncpa %s26, 0
    loop: start=0, step=1, limit=4
    $region2: #{tpu_custom_call.1} parent=1 // loop_pre_header
      _
    $region3: #{tpu_custom_call.1} parent=1 // loop_header
      %s29 = sphi 0, %s33
      %p30 = scmp.ge.s32.totalorder %s29, 4
      %s36 = sphi 0, %s48
      %s37 = sphi 0, %s44
      %s38 = sphi 0, %s36
      %s39 = sphi 0, %s37
      %s40 = sphi 0, %s38
      %s41 = sphi 0, %s39
      %s51 = sphi 0, %s53
      %s54 = sphi 0, %s51
      %s55 = sphi 0, %s54
      %s71 = sphi 0, %s55
      %s77 = sphi 0, %s79
      %s80 = sphi 0, %s77
      %s81 = sphi 0, %s80
      %s97 = sphi 0, %s81
      %s101 = sphi 0, %s101
      %s103 = sphi 0, %s101
      %s104 = sphi 0, %s103
      %s118 = sphi 0, %s104
      %s122 = sphi 0, %s122
      %s124 = sphi 0, %s122
      %s125 = sphi 0, %s124
      %s139 = sphi 0, %s125
      %s143 = sphi 0, %s143
      %s145 = sphi 0, %s143
      %s146 = sphi 0, %s145
      %s160 = sphi 0, %s146
      %s164 = sphi 0, %s164
      %s166 = sphi 0, %s164
      %s167 = sphi 0, %s166
      %s181 = sphi 0, %s167
      %s187 = sphi 0, %s189
      %s190 = sphi 0, %s187
      %s191 = sphi 0, %s190
      %s207 = sphi 0, %s191
      %s213 = sphi 0, %s215
      %s216 = sphi 0, %s213
      %s217 = sphi 0, %s216
      %s233 = sphi 0, %s217
      %s241 = sphi 0, %s243
      %s244 = sphi 0, %s241
      %s245 = sphi 0, %s244
      %s261 = sphi 0, %s245
    $region4: #{tpu_custom_call.1} parent=1 // loop_header_branch
      %32 = sbr.rel (%p30) target = $region8
    $region5: #{tpu_custom_call.1} parent=1 // loop_body
      %s34 = ssub.s32 %s29, 1
      %s35 = ssub.s32 %s29, 2
      %s42 = sadd.s32 1, %s37
      %p43 = scmp.ge.s32.totalorder %s42, 1
      %s44 = scalar_select %p43, 0, %s42
      %s45 = sadd.s32 1, %s36
      %s46 = scalar_select %p43, %s45, %s36
      %p47 = scmp.ge.s32.totalorder %s46, 2
      %s48 = scalar_select %p47, 0, %s46
      %s49 = ssub.s32 %s36, %s48
      %p50 = scmp.eq.s32.totalorder %s49, 0
      %s52 = sadd.s32 %s51, 1
      %s53 = scalar_select %p50, %s51, %s52
      %p56 = pneg %p50
      %p57 = scmp.eq.s32.totalorder %s29, 1
      %p58 = por %p56, %p57
      %p59 = scmp.ne.s32.totalorder %s51, %s54
      %p60 = scmp.eq.s32.totalorder %s29, 0
      %p61 = por %p59, %p60
      %p62 = scmp.ne.s32.totalorder %s51, %s54
      %p63 = scmp.eq.s32.totalorder %s34, 1
      %p64 = por %p62, %p63
      %p65 = scmp.ne.s32.totalorder %s54, %s55
      %p66 = scmp.eq.s32.totalorder %s34, 0
      %p67 = por %p65, %p66
      %p68 = scmp.ne.s32.totalorder %s54, %s55
      %p69 = scmp.eq.s32.totalorder %s35, 1
      %p70 = por %p68, %p69
      %p72 = scmp.ne.s32.totalorder %s55, %s71
      %p73 = scmp.eq.s32.totalorder %s35, 0
      %p74 = por %p72, %p73
      %s75 = ssub.s32 %s36, %s48
      %p76 = scmp.eq.s32.totalorder %s75, 0
      %s78 = sadd.s32 %s77, 1
      %s79 = scalar_select %p76, %s77, %s78
      %p82 = pneg %p76
      %p83 = scmp.eq.s32.totalorder %s29, 1
      %p84 = por %p82, %p83
      %p85 = scmp.ne.s32.totalorder %s77, %s80
      %p86 = scmp.eq.s32.totalorder %s29, 0
      %p87 = por %p85, %p86
      %p88 = scmp.ne.s32.totalorder %s77, %s80
      %p89 = scmp.eq.s32.totalorder %s34, 1
      %p90 = por %p88, %p89
      %p91 = scmp.ne.s32.totalorder %s80, %s81
      %p92 = scmp.eq.s32.totalorder %s34, 0
      %p93 = por %p91, %p92
      %p94 = scmp.ne.s32.totalorder %s80, %s81
      %p95 = scmp.eq.s32.totalorder %s35, 1
      %p96 = por %p94, %p95
      %p98 = scmp.ne.s32.totalorder %s81, %s97
      %p99 = scmp.eq.s32.totalorder %s35, 0
      %p100 = por %p98, %p99
      %s102 = sadd.s32 %s101, 1
      %p105 = scmp.eq.s32.totalorder %s29, 1
      %p106 = scmp.ne.s32.totalorder %s101, %s103
      %p107 = scmp.eq.s32.totalorder %s29, 0
      %p108 = por %p106, %p107
      %p109 = scmp.ne.s32.totalorder %s101, %s103
      %p110 = scmp.eq.s32.totalorder %s34, 1
      %p111 = por %p109, %p110
      %p112 = scmp.ne.s32.totalorder %s103, %s104
      %p113 = scmp.eq.s32.totalorder %s34, 0
      %p114 = por %p112, %p113
      %p115 = scmp.ne.s32.totalorder %s103, %s104
      %p116 = scmp.eq.s32.totalorder %s35, 1
      %p117 = por %p115, %p116
      %p119 = scmp.ne.s32.totalorder %s104, %s118
      %p120 = scmp.eq.s32.totalorder %s35, 0
      %p121 = por %p119, %p120
      %s123 = sadd.s32 %s122, 1
      %p126 = scmp.eq.s32.totalorder %s29, 1
      %p127 = scmp.ne.s32.totalorder %s122, %s124
      %p128 = scmp.eq.s32.totalorder %s29, 0
      %p129 = por %p127, %p128
      %p130 = scmp.ne.s32.totalorder %s122, %s124
      %p131 = scmp.eq.s32.totalorder %s34, 1
      %p132 = por %p130, %p131
      %p133 = scmp.ne.s32.totalorder %s124, %s125
      %p134 = scmp.eq.s32.totalorder %s34, 0
      %p135 = por %p133, %p134
      %p136 = scmp.ne.s32.totalorder %s124, %s125
      %p137 = scmp.eq.s32.totalorder %s35, 1
      %p138 = por %p136, %p137
      %p140 = scmp.ne.s32.totalorder %s125, %s139
      %p141 = scmp.eq.s32.totalorder %s35, 0
      %p142 = por %p140, %p141
      %s144 = sadd.s32 %s143, 1
      %p147 = scmp.eq.s32.totalorder %s29, 1
      %p148 = scmp.ne.s32.totalorder %s143, %s145
      %p149 = scmp.eq.s32.totalorder %s29, 0
      %p150 = por %p148, %p149
      %p151 = scmp.ne.s32.totalorder %s143, %s145
      %p152 = scmp.eq.s32.totalorder %s34, 1
      %p153 = por %p151, %p152
      %p154 = scmp.ne.s32.totalorder %s145, %s146
      %p155 = scmp.eq.s32.totalorder %s34, 0
      %p156 = por %p154, %p155
      %p157 = scmp.ne.s32.totalorder %s145, %s146
      %p158 = scmp.eq.s32.totalorder %s35, 1
      %p159 = por %p157, %p158
      %p161 = scmp.ne.s32.totalorder %s146, %s160
      %p162 = scmp.eq.s32.totalorder %s35, 0
      %p163 = por %p161, %p162
      %s165 = sadd.s32 %s164, 1
      %p168 = scmp.eq.s32.totalorder %s29, 1
      %p169 = scmp.ne.s32.totalorder %s164, %s166
      %p170 = scmp.eq.s32.totalorder %s29, 0
      %p171 = por %p169, %p170
      %p172 = scmp.ne.s32.totalorder %s164, %s166
      %p173 = scmp.eq.s32.totalorder %s34, 1
      %p174 = por %p172, %p173
      %p175 = scmp.ne.s32.totalorder %s166, %s167
      %p176 = scmp.eq.s32.totalorder %s34, 0
      %p177 = por %p175, %p176
      %p178 = scmp.ne.s32.totalorder %s166, %s167
      %p179 = scmp.eq.s32.totalorder %s35, 1
      %p180 = por %p178, %p179
      %p182 = scmp.ne.s32.totalorder %s167, %s181
      %p183 = scmp.eq.s32.totalorder %s35, 0
      %p184 = por %p182, %p183
      %s185 = ssub.s32 %s37, %s44
      %p186 = scmp.eq.s32.totalorder %s185, 0
      %s188 = sadd.s32 %s187, 1
      %s189 = scalar_select %p186, %s187, %s188
      %p192 = pneg %p186
      %p193 = scmp.eq.s32.totalorder %s29, 1
      %p194 = por %p192, %p193
      %p195 = scmp.ne.s32.totalorder %s187, %s190
      %p196 = scmp.eq.s32.totalorder %s29, 0
      %p197 = por %p195, %p196
      %p198 = scmp.ne.s32.totalorder %s187, %s190
      %p199 = scmp.eq.s32.totalorder %s34, 1
      %p200 = por %p198, %p199
      %p201 = scmp.ne.s32.totalorder %s190, %s191
      %p202 = scmp.eq.s32.totalorder %s34, 0
      %p203 = por %p201, %p202
      %p204 = scmp.ne.s32.totalorder %s190, %s191
      %p205 = scmp.eq.s32.totalorder %s35, 1
      %p206 = por %p204, %p205
      %p208 = scmp.ne.s32.totalorder %s191, %s207
      %p209 = scmp.eq.s32.totalorder %s35, 0
      %p210 = por %p208, %p209
      %s211 = ssub.s32 %s36, %s48
      %p212 = scmp.eq.s32.totalorder %s211, 0
      %s214 = sadd.s32 %s213, 1
      %s215 = scalar_select %p212, %s213, %s214
      %p218 = pneg %p212
      %p219 = scmp.eq.s32.totalorder %s29, 1
      %p220 = por %p218, %p219
      %p221 = scmp.ne.s32.totalorder %s213, %s216
      %p222 = scmp.eq.s32.totalorder %s29, 0
      %p223 = por %p221, %p222
      %p224 = scmp.ne.s32.totalorder %s213, %s216
      %p225 = scmp.eq.s32.totalorder %s34, 1
      %p226 = por %p224, %p225
      %p227 = scmp.ne.s32.totalorder %s216, %s217
      %p228 = scmp.eq.s32.totalorder %s34, 0
      %p229 = por %p227, %p228
      %p230 = scmp.ne.s32.totalorder %s216, %s217
      %p231 = scmp.eq.s32.totalorder %s35, 1
      %p232 = por %p230, %p231
      %p234 = scmp.ne.s32.totalorder %s217, %s233
      %p235 = scmp.eq.s32.totalorder %s35, 0
      %p236 = por %p234, %p235
      %s237 = ssub.s32 %s36, %s48
      %s238 = ssub.s32 %s37, %s44
      %s239 = sor.u32 %s237, %s238
      %p240 = scmp.eq.s32.totalorder %s239, 0
      %s242 = sadd.s32 %s241, 1
      %s243 = scalar_select %p240, %s241, %s242
      %p246 = pneg %p240
      %p247 = scmp.eq.s32.totalorder %s29, 1
      %p248 = por %p246, %p247
      %p249 = scmp.ne.s32.totalorder %s241, %s244
      %p250 = scmp.eq.s32.totalorder %s29, 0
      %p251 = por %p249, %p250
      %p252 = scmp.ne.s32.totalorder %s241, %s244
      %p253 = scmp.eq.s32.totalorder %s34, 1
      %p254 = por %p252, %p253
      %p255 = scmp.ne.s32.totalorder %s244, %s245
      %p256 = scmp.eq.s32.totalorder %s34, 0
      %p257 = por %p255, %p256
      %p258 = scmp.ne.s32.totalorder %s244, %s245
      %p259 = scmp.eq.s32.totalorder %s35, 1
      %p260 = por %p258, %p259
      %p262 = scmp.ne.s32.totalorder %s245, %s261
      %p263 = scmp.eq.s32.totalorder %s35, 0
      %p264 = por %p262, %p263
      %p265 = scmp.le.s32.totalorder 1, %s29
      %p266 = scmp.lt.s32.totalorder %s29, 3
      %p267 = pnand %p265, %p266
      %p268 = pneg %p267
      // Predicated region
      $region9: #{tpu_custom_call.1} parent=5 // pred_check
        _
      $region10: #{tpu_custom_call.1} parent=5 // pred_check_branch
        %270 = sbr.rel (%p267) target = $region12
      $region11: #{tpu_custom_call.1} parent=5 // pred_region
        %s271 = ssub.s32 %s29, 1
        // Predicated region
        $region13: #{tpu_custom_call.1} parent=11 // pred_check
          %p272 = pneg %p114
        $region14: #{tpu_custom_call.1} parent=11 // pred_check_branch
          %274 = sbr.rel (%p272) target = $region16
        $region15: #{tpu_custom_call.1} parent=11 // pred_region
          %s276 = ssub.s32 1024, 1024
          %277 = vsyncadd [#allocation11], %s276
          %s278 = sshll.u32 [#allocation12], 4
          %s279 = int_to_ptr.vmem [resolvable:$true] %s278
          %284 = dma.hbm_to_vmem [thread:$0]  %s2, 1024, %s279, [#allocation11], 512, 512, 32
        $region16: #{tpu_custom_call.1} parent=11 // pred_fallthru
          _
        // Predicated region
        $region17: #{tpu_custom_call.1} parent=11 // pred_check
          %p285 = pneg %p135
        $region18: #{tpu_custom_call.1} parent=11 // pred_check_branch
          %287 = sbr.rel (%p285) target = $region20
        $region19: #{tpu_custom_call.1} parent=11 // pred_region
          %s289 = ssub.s32 1024, 1024
          %290 = vsyncadd [#allocation14], %s289
          %s291 = sshll.u32 [#allocation13], 4
          %s292 = int_to_ptr.vmem [resolvable:$true] %s291
          %297 = dma.hbm_to_vmem [thread:$0]  %s3, 1024, %s292, [#allocation14], 512, 512, 32
        $region20: #{tpu_custom_call.1} parent=11 // pred_fallthru
          _
        // Predicated region
        $region21: #{tpu_custom_call.1} parent=11 // pred_check
          %p298 = pneg %p156
        $region22: #{tpu_custom_call.1} parent=11 // pred_check_branch
          %300 = sbr.rel (%p298) target = $region24
        $region23: #{tpu_custom_call.1} parent=11 // pred_region
          _
        $region24: #{tpu_custom_call.1} parent=11 // pred_fallthru
          _
        // Predicated region
        $region25: #{tpu_custom_call.1} parent=11 // pred_check
          %p301 = pneg %p177
        $region26: #{tpu_custom_call.1} parent=11 // pred_check_branch
          %303 = sbr.rel (%p301) target = $region28
        $region27: #{tpu_custom_call.1} parent=11 // pred_region
          %s305 = ssub.s32 2048, 2048
          %306 = vsyncadd [#allocation14], %s305
          %s307 = sshll.u32 [#allocation15], 4
          %s308 = int_to_ptr.vmem [resolvable:$true] %s307
          %313 = dma.hbm_to_vmem [thread:$0]  %s5, 2048, %s308, [#allocation14], 128, 128, 8
        $region28: #{tpu_custom_call.1} parent=11 // pred_fallthru
          _
        // Predicated region
        $region29: #{tpu_custom_call.1} parent=11 // pred_check
          %p314 = pneg %p203
        $region30: #{tpu_custom_call.1} parent=11 // pred_check_branch
          %316 = sbr.rel (%p314) target = $region32
        $region31: #{tpu_custom_call.1} parent=11 // pred_region
          %s317 = smul.u32 8, %s39
          %s319 = ssub.s32 16384, 16384
          %320 = vsyncadd [#allocation17], %s319
          %s321 = smul.addr %s317, 128
          %s322 = scalar_lea.hbm %s6, %s321
          %s323 = sshll.u32 [#allocation16], 4
          %s324 = int_to_ptr.vmem [resolvable:$true] %s323
          %329 = dma.hbm_to_vmem [thread:$0]  %s322, 16384, %s324, [#allocation17], 1024, 1024, 64
        $region32: #{tpu_custom_call.1} parent=11 // pred_fallthru
          _
      $region12: #{tpu_custom_call.1} parent=5 // pred_fallthru
        _
      %p330 = scmp.lt.s32.totalorder %s29, 2
      // Predicated region
      $region33: #{tpu_custom_call.1} parent=5 // pred_check
        %p331 = pneg %p330
      $region34: #{tpu_custom_call.1} parent=5 // pred_check_branch
        %333 = sbr.rel (%p331) target = $region36
      $region35: #{tpu_custom_call.1} parent=5 // pred_region
        // Predicated region
        $region37: #{tpu_custom_call.1} parent=35 // pred_check
          %p334 = pneg %p61
        $region38: #{tpu_custom_call.1} parent=35 // pred_check_branch
          %336 = sbr.rel (%p334) target = $region40
        $region39: #{tpu_custom_call.1} parent=35 // pred_region
          %s337 = sand.u32 %s51, 1
          %s338 = scalar_lea.sflag [#allocation8], %s337
          %s339 = sand.u32 %s51, 1
          %s340 = smul.addr %s339, 8
          %s341 = scalar_lea.vmem [#allocation7], %s340
          %s343 = ssub.s32 128, 128
          %344 = vsyncadd %s338, %s343
          %s345 = smul.addr %s36, 128
          %s346 = scalar_lea.hbm %s0, %s345
          %s348 = sshll.u32 %s341, 4
          %s349 = int_to_ptr.vmem [resolvable:$true] %s348
          %351 = dma.hbm_to_vmem [thread:$0]  %s346, 128, %s349, %s338
        $region40: #{tpu_custom_call.1} parent=35 // pred_fallthru
          _
        // Predicated region
        $region41: #{tpu_custom_call.1} parent=35 // pred_check
          %p352 = pneg %p87
        $region42: #{tpu_custom_call.1} parent=35 // pred_check_branch
          %354 = sbr.rel (%p352) target = $region44
        $region43: #{tpu_custom_call.1} parent=35 // pred_region
          %s355 = sand.u32 %s29, 1
          %s356 = scalar_lea.sflag [#allocation11], %s355
          %s357 = sand.u32 %s77, 1
          %s358 = smul.addr %s357, 8
          %s359 = scalar_lea.vmem [#allocation10], %s358
          %s361 = ssub.s32 128, 128
          %362 = vsyncadd %s356, %s361
          %s363 = smul.addr %s36, 128
          %s364 = scalar_lea.hbm %s1, %s363
          %s366 = sshll.u32 %s359, 4
          %s367 = int_to_ptr.vmem [resolvable:$true] %s366
          %369 = dma.hbm_to_vmem [thread:$0]  %s364, 128, %s367, %s356
        $region44: #{tpu_custom_call.1} parent=35 // pred_fallthru
          _
      $region36: #{tpu_custom_call.1} parent=5 // pred_fallthru
        _
      %p370 = scmp.le.s32.totalorder 1, %s29
      %p371 = scmp.lt.s32.totalorder %s29, 3
      %p372 = pnand %p370, %p371
      %p373 = pneg %p372
      // Predicated region
      $region45: #{tpu_custom_call.1} parent=5 // pred_check
        _
      $region46: #{tpu_custom_call.1} parent=5 // pred_check_branch
        %375 = sbr.rel (%p372) target = $region48
      $region47: #{tpu_custom_call.1} parent=5 // pred_region
        %s376 = ssub.s32 %s29, 1
        %s377 = sand.u32 %s54, 1
        %s378 = scalar_lea.sflag [#allocation8], %s377
        %s379 = sand.u32 %s54, 1
        %s380 = smul.addr %s379, 8
        %s381 = scalar_lea.vmem [#allocation7], %s380
        // Predicated region
        $region49: #{tpu_custom_call.1} parent=47 // pred_check
          %p382 = pneg %p67
        $region50: #{tpu_custom_call.1} parent=47 // pred_check_branch
          %384 = sbr.rel (%p382) target = $region52
        $region51: #{tpu_custom_call.1} parent=47 // pred_region
          %385 = dma.done %s378, 128
        $region52: #{tpu_custom_call.1} parent=47 // pred_fallthru
          _
        %s386 = sand.u32 %s34, 1
        %s387 = scalar_lea.sflag [#allocation11], %s386
        %s388 = sand.u32 %s80, 1
        %s389 = smul.addr %s388, 8
        %s390 = scalar_lea.vmem [#allocation10], %s389
        // Predicated region
        $region53: #{tpu_custom_call.1} parent=47 // pred_check
          %p391 = pneg %p93
        $region54: #{tpu_custom_call.1} parent=47 // pred_check_branch
          %393 = sbr.rel (%p391) target = $region56
        $region55: #{tpu_custom_call.1} parent=47 // pred_region
          %394 = dma.done %s387, 128
        $region56: #{tpu_custom_call.1} parent=47 // pred_fallthru
          _
        // Predicated region
        $region57: #{tpu_custom_call.1} parent=47 // pred_check
          %p395 = pneg %p114
        $region58: #{tpu_custom_call.1} parent=47 // pred_check_branch
          %397 = sbr.rel (%p395) target = $region60
        $region59: #{tpu_custom_call.1} parent=47 // pred_region
          %398 = dma.done [#allocation11], 1024
        $region60: #{tpu_custom_call.1} parent=47 // pred_fallthru
          _
        // Predicated region
        $region61: #{tpu_custom_call.1} parent=47 // pred_check
          %p399 = pneg %p135
        $region62: #{tpu_custom_call.1} parent=47 // pred_check_branch
          %401 = sbr.rel (%p399) target = $region64
        $region63: #{tpu_custom_call.1} parent=47 // pred_region
          %402 = dma.done [#allocation14], 1024
        $region64: #{tpu_custom_call.1} parent=47 // pred_fallthru
          _
        // Predicated region
        $region65: #{tpu_custom_call.1} parent=47 // pred_check
          %p403 = pneg %p177
        $region66: #{tpu_custom_call.1} parent=47 // pred_check_branch
          %405 = sbr.rel (%p403) target = $region68
        $region67: #{tpu_custom_call.1} parent=47 // pred_region
          %406 = dma.done [#allocation14], 2048
        $region68: #{tpu_custom_call.1} parent=47 // pred_fallthru
          _
        // Predicated region
        $region69: #{tpu_custom_call.1} parent=47 // pred_check
          %p407 = pneg %p203
        $region70: #{tpu_custom_call.1} parent=47 // pred_check_branch
          %409 = sbr.rel (%p407) target = $region72
        $region71: #{tpu_custom_call.1} parent=47 // pred_region
          %410 = dma.done [#allocation17], 16384
        $region72: #{tpu_custom_call.1} parent=47 // pred_fallthru
          _
        %s411 = sand.u32 %s54, 1
        %s412 = scalar_lea.sflag [#allocation8], %s411
        %s413 = sand.u32 %s54, 1
        %s414 = smul.addr %s413, 8
        %s415 = scalar_lea.vmem [#allocation7], %s414
        %p416 = pneg %p67
        %p417 = pneg %p64
        %s418 = sand.u32 %s34, 1
        %s419 = scalar_lea.sflag [#allocation11], %s418
        %s420 = sand.u32 %s80, 1
        %s421 = smul.addr %s420, 8
        %s422 = scalar_lea.vmem [#allocation10], %s421
        %p423 = pneg %p93
        %p424 = pneg %p90
        %p425 = pneg %p114
        %p426 = pneg %p111
        %p427 = pneg %p135
        %p428 = pneg %p132
        %p429 = pneg %p156
        %p430 = pneg %p153
        %p431 = pneg %p177
        %p432 = pneg %p174
        %p433 = pneg %p203
        %p434 = pneg %p200
        %p435 = pneg %p229
        %p436 = pneg %p226
        %s437 = sand.u32 %s216, 1
        %s438 = scalar_lea.sflag [#allocation9], %s437
        %s439 = sand.u32 %s216, 1
        %s440 = smul.addr %s439, 8
        %s441 = scalar_lea.vmem [#allocation18], %s440
        %p442 = pneg %p257
        %p443 = pneg %p254
        %s444 = sand.u32 %s244, 1
        %s445 = scalar_lea.sflag [#allocation20], %s444
        %s446 = sand.u32 %s244, 1
        %s447 = smul.addr %s446, 64
        %s448 = scalar_lea.vmem [#allocation19], %s447
        %s449 = smul.u32 8, %s39
        %s450 = smul.u32 8, %s39
        %p451 = scmp.eq.s32.totalorder %s39, 0
        // Predicated region
        $region73: #{tpu_custom_call.1} parent=47 // pred_check
          %p452 = pneg %p451
        $region74: #{tpu_custom_call.1} parent=47 // pred_check_branch
          %454 = sbr.rel (%p452) target = $region76
        $region75: #{tpu_custom_call.1} parent=47 // pred_region
          %v455 = vld [vmem:[%s381] sm:$0xff]
          %v456 = vld [vmem:[#allocation12 + $0x10] sm:$0xff]
          %v457 = vld [vmem:[#allocation12 + $0x18] sm:$0xff]
          %v458 = vld [vmem:[#allocation12 + $0x30] sm:$0xff]
          %v459 = vld [vmem:[#allocation12 + $0x38] sm:$0xff]
          %v460 = vld [vmem:[%s390] sm:$0xff]
          %v461 = vld [vmem:[#allocation13 + $0x10] sm:$0xff]
          %v462 = vld [vmem:[#allocation13 + $0x18] sm:$0xff]
          %v463 = vld [vmem:[#allocation13 + $0x30] sm:$0xff]
          %v464 = vld [vmem:[#allocation13 + $0x38] sm:$0xff]
          %vm465 = vcmask 130048
          %v467 = vsel %vm465, %v460, 0
          %469 = vmatprep.subr.mxu0 %v462
          %470 = vmatpush1.msra.mxu0 %v461
          %471 = vmatprep.subr.mxu0 %v464
          %472 = vmatpush1.msra.mxu0 %v463
          %473 = vmatprep.subr.mxu0 0.0
          %474 = vmatpush1.msra.mxu0 0.0
          %475 = vmatprep.subr.mxu0 0.0
          %476 = vmatpush1.msra.mxu0 0.0
          %477 = vmatprep.subr.mxu0 0.0
          %478 = vmatpush1.msra.mxu0 0.0
          %479 = vmatprep.subr.mxu0 0.0
          %480 = vmatpush1.msra.mxu0 0.0
          %481 = vmatprep.subr.mxu0 0.0
          %482 = vmatpush1.msra.mxu0 0.0
          %483 = vmatprep.subr.mxu0 0.0
          %484 = vmatpush1.msra.mxu0 0.0
          %485 = vmatprep.subr.mxu0 0.0
          %486 = vmatpush1.msra.mxu0 0.0
          %487 = vmatprep.subr.mxu0 0.0
          %488 = vmatpush1.msra.mxu0 0.0
          %489 = vmatprep.subr.mxu0 0.0
          %490 = vmatpush1.msra.mxu0 0.0
          %491 = vmatprep.subr.mxu0 0.0
          %492 = vmatpush1.msra.mxu0 0.0
          %493 = vmatprep.subr.mxu0 0.0
          %494 = vmatpush1.msra.mxu0 0.0
          %495 = vmatprep.subr.mxu0 0.0
          %496 = vmatpush1.msra.mxu0 0.0
          %497 = vmatprep.subr.mxu0 0.0
          %498 = vmatpush1.msra.mxu0 0.0
          %499 = vmatprep.subr.mxu0 0.0
          %500 = vmatpush1.msra.mxu0 0.0
          %501 = vmatprep.subr.mxu0 0.0
          %502 = vmatpush1.msra.mxu0 0.0
          %503 = vmatprep.subr.mxu0 0.0
          %504 = vmatpush1.msra.mxu0 0.0
          %505 = vmatprep.subr.mxu0 0.0
          %506 = vmatpush1.msra.mxu0 0.0
          %507 = vmatprep.subr.mxu0 0.0
          %508 = vmatpush1.msra.mxu0 0.0
          %509 = vmatprep.subr.mxu0 0.0
          %510 = vmatpush1.msra.mxu0 0.0
          %511 = vmatprep.subr.mxu0 0.0
          %512 = vmatpush1.msra.mxu0 0.0
          %513 = vmatprep.subr.mxu0 0.0
          %514 = vmatpush1.msra.mxu0 0.0
          %515 = vmatprep.subr.mxu0 0.0
          %516 = vmatpush1.msra.mxu0 0.0
          %517 = vmatprep.subr.mxu0 0.0
          %518 = vmatpush1.msra.mxu0 0.0
          %519 = vmatprep.subr.mxu0 0.0
          %520 = vmatpush1.msra.mxu0 0.0
          %521 = vmatprep.subr.mxu0 0.0
          %522 = vmatpush1.msra.mxu0 0.0
          %523 = vmatprep.subr.mxu0 0.0
          %524 = vmatpush1.msra.mxu0 0.0
          %525 = vmatprep.subr.mxu0 0.0
          %526 = vmatpush1.msra.mxu0 0.0
          %527 = vmatprep.subr.mxu0 0.0
          %528 = vmatpush1.msra.mxu0 0.0
          %529 = vmatprep.subr.mxu0 0.0
          %530 = vmatpush1.msra.mxu0 0.0
          %531 = vmatprep.subr.mxu0 0.0
          %532 = vmatpush1.msra.mxu0 0.0
          %533 = vmatprep.mubr.f32.mxu0 0.0
          %534 = vmatmul.mubr.f32.gmra.mrb[0].mxu0 %v467
          %v535 = vpop.f32.mrb[0].mxu0
          %v536 = vadd.f32 0.0, %v535
          %v537 = vpop.f32.mrb[0].mxu0
          %v538 = vadd.f32 0.0, %v537
          %539 = vdwg.mxu0
          %v541 = vsel %vm465, %v455, 0
          %543 = vmatprep.subr.mxu0 %v457
          %544 = vmatpush1.msra.mxu0 %v456
          %545 = vmatprep.subr.mxu0 %v459
          %546 = vmatpush1.msra.mxu0 %v458
          %547 = vmatprep.subr.mxu0 0.0
          %548 = vmatpush1.msra.mxu0 0.0
          %549 = vmatprep.subr.mxu0 0.0
          %550 = vmatpush1.msra.mxu0 0.0
          %551 = vmatprep.subr.mxu0 0.0
          %552 = vmatpush1.msra.mxu0 0.0
          %553 = vmatprep.subr.mxu0 0.0
          %554 = vmatpush1.msra.mxu0 0.0
          %555 = vmatprep.subr.mxu0 0.0
          %556 = vmatpush1.msra.mxu0 0.0
          %557 = vmatprep.subr.mxu0 0.0
          %558 = vmatpush1.msra.mxu0 0.0
          %559 = vmatprep.subr.mxu0 0.0
          %560 = vmatpush1.msra.mxu0 0.0
          %561 = vmatprep.subr.mxu0 0.0
          %562 = vmatpush1.msra.mxu0 0.0
          %563 = vmatprep.subr.mxu0 0.0
          %564 = vmatpush1.msra.mxu0 0.0
          %565 = vmatprep.subr.mxu0 0.0
          %566 = vmatpush1.msra.mxu0 0.0
          %567 = vmatprep.subr.mxu0 0.0
          %568 = vmatpush1.msra.mxu0 0.0
          %569 = vmatprep.subr.mxu0 0.0
          %570 = vmatpush1.msra.mxu0 0.0
          %571 = vmatprep.subr.mxu0 0.0
          %572 = vmatpush1.msra.mxu0 0.0
          %573 = vmatprep.subr.mxu0 0.0
          %574 = vmatpush1.msra.mxu0 0.0
          %575 = vmatprep.subr.mxu0 0.0
          %576 = vmatpush1.msra.mxu0 0.0
          %577 = vmatprep.subr.mxu0 0.0
          %578 = vmatpush1.msra.mxu0 0.0
          %579 = vmatprep.subr.mxu0 0.0
          %580 = vmatpush1.msra.mxu0 0.0
          %581 = vmatprep.subr.mxu0 0.0
          %582 = vmatpush1.msra.mxu0 0.0
          %583 = vmatprep.subr.mxu0 0.0
          %584 = vmatpush1.msra.mxu0 0.0
          %585 = vmatprep.subr.mxu0 0.0
          %586 = vmatpush1.msra.mxu0 0.0
          %587 = vmatprep.subr.mxu0 0.0
          %588 = vmatpush1.msra.mxu0 0.0
          %589 = vmatprep.subr.mxu0 0.0
          %590 = vmatpush1.msra.mxu0 0.0
          %591 = vmatprep.subr.mxu0 0.0
          %592 = vmatpush1.msra.mxu0 0.0
          %593 = vmatprep.subr.mxu0 0.0
          %594 = vmatpush1.msra.mxu0 0.0
          %595 = vmatprep.subr.mxu0 0.0
          %596 = vmatpush1.msra.mxu0 0.0
          %597 = vmatprep.subr.mxu0 0.0
          %598 = vmatpush1.msra.mxu0 0.0
          %599 = vmatprep.subr.mxu0 0.0
          %600 = vmatpush1.msra.mxu0 0.0
          %601 = vmatprep.subr.mxu0 0.0
          %602 = vmatpush1.msra.mxu0 0.0
          %603 = vmatprep.subr.mxu0 0.0
          %604 = vmatpush1.msra.mxu0 0.0
          %605 = vmatprep.subr.mxu0 0.0
          %606 = vmatpush1.msra.mxu0 0.0
          %607 = vmatprep.mubr.f32.mxu0 0.0
          %608 = vmatmul.mubr.f32.gmra.mrb[0].mxu0 %v541
          %v609 = vpop.f32.mrb[0].mxu0
          %v610 = vadd.f32 %v536, %v609
          %v611 = vpop.f32.mrb[0].mxu0
          %v612 = vadd.f32 %v538, %v611
          %613 = vdwg.mxu0
          %v614 = vld [vmem:[%s4 + $0x2] sm:$0x3]
          %v616 = vlaneseq
          %v617 = vshrl.u32 %v616, 7
          %v618 = vsub.s32 0, %v617
          %v619 = vrot.slane %v614, %v618
          %v620 = vlaneseq
          %v621 = vshrl.u32 %v620, 7
          %v622 = vsub.s32 1, %v621
          %v623 = vrot.slane %v614, %v622
          %v626 = vadd.f32 %v610, %v619
          %v627 = vadd.f32 %v612, %v623
          %vm628 = vcmp.gt.f32.partialorder %v626, 0.0
          %vm629 = vcmp.gt.f32.partialorder %v627, 0.0
          %v630 = vmul.f32 %v626, 0.1
          %v631 = vmul.f32 %v627, 0.1
          %v632 = vsel %vm628, %v626, %v630
          %v633 = vsel %vm629, %v627, %v631
          %634 = vst [vmem:[#allocation5] sm:$0xff] %v632
          %635 = vst [vmem:[#allocation5 + $0x8] sm:$0xff] %v633
          %v636 = vld [vmem:[%s381] sm:$0xff]
          %v637 = vld [vmem:[#allocation12] sm:$0xff]
          %v638 = vld [vmem:[#allocation12 + $0x20] sm:$0xff]
          %v639 = vld [vmem:[%s390] sm:$0xff]
          %v640 = vld [vmem:[#allocation13] sm:$0xff]
          %v641 = vld [vmem:[#allocation13 + $0x20] sm:$0xff]
          %v643 = vsel %vm465, %v639, 0
          %645 = vmatprep.subr.mxu0 0.0
          %646 = vmatpush1.msra.mxu0 %v640
          %647 = vmatprep.subr.mxu0 0.0
          %648 = vmatpush1.msra.mxu0 %v641
          %649 = vmatprep.subr.mxu0 0.0
          %650 = vmatpush1.msra.mxu0 0.0
          %651 = vmatprep.subr.mxu0 0.0
          %652 = vmatpush1.msra.mxu0 0.0
          %653 = vmatprep.subr.mxu0 0.0
          %654 = vmatpush1.msra.mxu0 0.0
          %655 = vmatprep.subr.mxu0 0.0
          %656 = vmatpush1.msra.mxu0 0.0
          %657 = vmatprep.subr.mxu0 0.0
          %658 = vmatpush1.msra.mxu0 0.0
          %659 = vmatprep.subr.mxu0 0.0
          %660 = vmatpush1.msra.mxu0 0.0
          %661 = vmatprep.subr.mxu0 0.0
          %662 = vmatpush1.msra.mxu0 0.0
          %663 = vmatprep.subr.mxu0 0.0
          %664 = vmatpush1.msra.mxu0 0.0
          %665 = vmatprep.subr.mxu0 0.0
          %666 = vmatpush1.msra.mxu0 0.0
          %667 = vmatprep.subr.mxu0 0.0
          %668 = vmatpush1.msra.mxu0 0.0
          %669 = vmatprep.subr.mxu0 0.0
          %670 = vmatpush1.msra.mxu0 0.0
          %671 = vmatprep.subr.mxu0 0.0
          %672 = vmatpush1.msra.mxu0 0.0
          %673 = vmatprep.subr.mxu0 0.0
          %674 = vmatpush1.msra.mxu0 0.0
          %675 = vmatprep.subr.mxu0 0.0
          %676 = vmatpush1.msra.mxu0 0.0
          %677 = vmatprep.subr.mxu0 0.0
          %678 = vmatpush1.msra.mxu0 0.0
          %679 = vmatprep.subr.mxu0 0.0
          %680 = vmatpush1.msra.mxu0 0.0
          %681 = vmatprep.subr.mxu0 0.0
          %682 = vmatpush1.msra.mxu0 0.0
          %683 = vmatprep.subr.mxu0 0.0
          %684 = vmatpush1.msra.mxu0 0.0
          %685 = vmatprep.subr.mxu0 0.0
          %686 = vmatpush1.msra.mxu0 0.0
          %687 = vmatprep.subr.mxu0 0.0
          %688 = vmatpush1.msra.mxu0 0.0
          %689 = vmatprep.subr.mxu0 0.0
          %690 = vmatpush1.msra.mxu0 0.0
          %691 = vmatprep.subr.mxu0 0.0
          %692 = vmatpush1.msra.mxu0 0.0
          %693 = vmatprep.subr.mxu0 0.0
          %694 = vmatpush1.msra.mxu0 0.0
          %695 = vmatprep.subr.mxu0 0.0
          %696 = vmatpush1.msra.mxu0 0.0
          %697 = vmatprep.subr.mxu0 0.0
          %698 = vmatpush1.msra.mxu0 0.0
          %699 = vmatprep.subr.mxu0 0.0
          %700 = vmatpush1.msra.mxu0 0.0
          %701 = vmatprep.subr.mxu0 0.0
          %702 = vmatpush1.msra.mxu0 0.0
          %703 = vmatprep.subr.mxu0 0.0
          %704 = vmatpush1.msra.mxu0 0.0
          %705 = vmatprep.subr.mxu0 0.0
          %706 = vmatpush1.msra.mxu0 0.0
          %707 = vmatprep.subr.mxu0 0.0
          %708 = vmatpush1.msra.mxu0 0.0
          %709 = vmatprep.mubr.f32.mxu0 0.0
          %710 = vmatmul.mubr.f32.gmra.mrb[0].mxu0 %v643
          %v711 = vpop.f32.mrb[0].mxu0
          %v712 = vadd.f32 0.0, %v711
          %v713 = vpop.f32.mrb[0].mxu0
          %714 = vdwg.mxu0
          %v716 = vsel %vm465, %v636, 0
          %718 = vmatprep.subr.mxu0 0.0
          %719 = vmatpush1.msra.mxu0 %v637
          %720 = vmatprep.subr.mxu0 0.0
          %721 = vmatpush1.msra.mxu0 %v638
          %722 = vmatprep.subr.mxu0 0.0
          %723 = vmatpush1.msra.mxu0 0.0
          %724 = vmatprep.subr.mxu0 0.0
          %725 = vmatpush1.msra.mxu0 0.0
          %726 = vmatprep.subr.mxu0 0.0
          %727 = vmatpush1.msra.mxu0 0.0
          %728 = vmatprep.subr.mxu0 0.0
          %729 = vmatpush1.msra.mxu0 0.0
          %730 = vmatprep.subr.mxu0 0.0
          %731 = vmatpush1.msra.mxu0 0.0
          %732 = vmatprep.subr.mxu0 0.0
          %733 = vmatpush1.msra.mxu0 0.0
          %734 = vmatprep.subr.mxu0 0.0
          %735 = vmatpush1.msra.mxu0 0.0
          %736 = vmatprep.subr.mxu0 0.0
          %737 = vmatpush1.msra.mxu0 0.0
          %738 = vmatprep.subr.mxu0 0.0
          %739 = vmatpush1.msra.mxu0 0.0
          %740 = vmatprep.subr.mxu0 0.0
          %741 = vmatpush1.msra.mxu0 0.0
          %742 = vmatprep.subr.mxu0 0.0
          %743 = vmatpush1.msra.mxu0 0.0
          %744 = vmatprep.subr.mxu0 0.0
          %745 = vmatpush1.msra.mxu0 0.0
          %746 = vmatprep.subr.mxu0 0.0
          %747 = vmatpush1.msra.mxu0 0.0
          %748 = vmatprep.subr.mxu0 0.0
          %749 = vmatpush1.msra.mxu0 0.0
          %750 = vmatprep.subr.mxu0 0.0
          %751 = vmatpush1.msra.mxu0 0.0
          %752 = vmatprep.subr.mxu0 0.0
          %753 = vmatpush1.msra.mxu0 0.0
          %754 = vmatprep.subr.mxu0 0.0
          %755 = vmatpush1.msra.mxu0 0.0
          %756 = vmatprep.subr.mxu0 0.0
          %757 = vmatpush1.msra.mxu0 0.0
          %758 = vmatprep.subr.mxu0 0.0
          %759 = vmatpush1.msra.mxu0 0.0
          %760 = vmatprep.subr.mxu0 0.0
          %761 = vmatpush1.msra.mxu0 0.0
          %762 = vmatprep.subr.mxu0 0.0
          %763 = vmatpush1.msra.mxu0 0.0
          %764 = vmatprep.subr.mxu0 0.0
          %765 = vmatpush1.msra.mxu0 0.0
          %766 = vmatprep.subr.mxu0 0.0
          %767 = vmatpush1.msra.mxu0 0.0
          %768 = vmatprep.subr.mxu0 0.0
          %769 = vmatpush1.msra.mxu0 0.0
          %770 = vmatprep.subr.mxu0 0.0
          %771 = vmatpush1.msra.mxu0 0.0
          %772 = vmatprep.subr.mxu0 0.0
          %773 = vmatpush1.msra.mxu0 0.0
          %774 = vmatprep.subr.mxu0 0.0
          %775 = vmatpush1.msra.mxu0 0.0
          %776 = vmatprep.subr.mxu0 0.0
          %777 = vmatpush1.msra.mxu0 0.0
          %778 = vmatprep.subr.mxu0 0.0
          %779 = vmatpush1.msra.mxu0 0.0
          %780 = vmatprep.subr.mxu0 0.0
          %781 = vmatpush1.msra.mxu0 0.0
          %782 = vmatprep.mubr.f32.mxu0 0.0
          %783 = vmatmul.mubr.f32.gmra.mrb[0].mxu0 %v716
          %v784 = vpop.f32.mrb[0].mxu0
          %v785 = vadd.f32 %v712, %v784
          %v786 = vpop.f32.mrb[0].mxu0
          %787 = vdwg.mxu0
          %v788 = vld [vmem:[%s4] sm:$0x1]
          %v790 = vlaneseq
          %v791 = vshrl.u32 %v790, 7
          %v792 = vsub.s32 0, %v791
          %v793 = vrot.slane %v788, %v792
          %v795 = vadd.f32 %v785, %v793
          %vm796 = vcmp.gt.f32.partialorder %v795, 0.0
          %v797 = vmul.f32 %v795, 0.1
          %v798 = vsel %vm796, %v795, %v797
          %799 = vst [vmem:[#allocation2] sm:$0xff] %v798
          %v800 = vld [vmem:[%s381] sm:$0xff]
          %v801 = vld [vmem:[#allocation12 + $0x8] sm:$0xff]
          %v802 = vld [vmem:[#allocation12 + $0x28] sm:$0xff]
          %v803 = vld [vmem:[%s390] sm:$0xff]
          %v804 = vld [vmem:[#allocation13 + $0x8] sm:$0xff]
          %v805 = vld [vmem:[#allocation13 + $0x28] sm:$0xff]
          %v807 = vsel %vm465, %v803, 0
          %809 = vmatprep.subr.mxu0 0.0
          %810 = vmatpush1.msra.mxu0 %v804
          %811 = vmatprep.subr.mxu0 0.0
          %812 = vmatpush1.msra.mxu0 %v805
          %813 = vmatprep.subr.mxu0 0.0
          %814 = vmatpush1.msra.mxu0 0.0
          %815 = vmatprep.subr.mxu0 0.0
          %816 = vmatpush1.msra.mxu0 0.0
          %817 = vmatprep.subr.mxu0 0.0
          %818 = vmatpush1.msra.mxu0 0.0
          %819 = vmatprep.subr.mxu0 0.0
          %820 = vmatpush1.msra.mxu0 0.0
          %821 = vmatprep.subr.mxu0 0.0
          %822 = vmatpush1.msra.mxu0 0.0
          %823 = vmatprep.subr.mxu0 0.0
          %824 = vmatpush1.msra.mxu0 0.0
          %825 = vmatprep.subr.mxu0 0.0
          %826 = vmatpush1.msra.mxu0 0.0
          %827 = vmatprep.subr.mxu0 0.0
          %828 = vmatpush1.msra.mxu0 0.0
          %829 = vmatprep.subr.mxu0 0.0
          %830 = vmatpush1.msra.mxu0 0.0
          %831 = vmatprep.subr.mxu0 0.0
          %832 = vmatpush1.msra.mxu0 0.0
          %833 = vmatprep.subr.mxu0 0.0
          %834 = vmatpush1.msra.mxu0 0.0
          %835 = vmatprep.subr.mxu0 0.0
          %836 = vmatpush1.msra.mxu0 0.0
          %837 = vmatprep.subr.mxu0 0.0
          %838 = vmatpush1.msra.mxu0 0.0
          %839 = vmatprep.subr.mxu0 0.0
          %840 = vmatpush1.msra.mxu0 0.0
          %841 = vmatprep.subr.mxu0 0.0
          %842 = vmatpush1.msra.mxu0 0.0
          %843 = vmatprep.subr.mxu0 0.0
          %844 = vmatpush1.msra.mxu0 0.0
          %845 = vmatprep.subr.mxu0 0.0
          %846 = vmatpush1.msra.mxu0 0.0
          %847 = vmatprep.subr.mxu0 0.0
          %848 = vmatpush1.msra.mxu0 0.0
          %849 = vmatprep.subr.mxu0 0.0
          %850 = vmatpush1.msra.mxu0 0.0
          %851 = vmatprep.subr.mxu0 0.0
          %852 = vmatpush1.msra.mxu0 0.0
          %853 = vmatprep.subr.mxu0 0.0
          %854 = vmatpush1.msra.mxu0 0.0
          %855 = vmatprep.subr.mxu0 0.0
          %856 = vmatpush1.msra.mxu0 0.0
          %857 = vmatprep.subr.mxu0 0.0
          %858 = vmatpush1.msra.mxu0 0.0
          %859 = vmatprep.subr.mxu0 0.0
          %860 = vmatpush1.msra.mxu0 0.0
          %861 = vmatprep.subr.mxu0 0.0
          %862 = vmatpush1.msra.mxu0 0.0
          %863 = vmatprep.subr.mxu0 0.0
          %864 = vmatpush1.msra.mxu0 0.0
          %865 = vmatprep.subr.mxu0 0.0
          %866 = vmatpush1.msra.mxu0 0.0
          %867 = vmatprep.subr.mxu0 0.0
          %868 = vmatpush1.msra.mxu0 0.0
          %869 = vmatprep.subr.mxu0 0.0
          %870 = vmatpush1.msra.mxu0 0.0
          %871 = vmatprep.subr.mxu0 0.0
          %872 = vmatpush1.msra.mxu0 0.0
          %873 = vmatprep.mubr.f32.mxu0 0.0
          %874 = vmatmul.mubr.f32.gmra.mrb[0].mxu0 %v807
          %v875 = vpop.f32.mrb[0].mxu0
          %v876 = vadd.f32 0.0, %v875
          %v877 = vpop.f32.mrb[0].mxu0
          %878 = vdwg.mxu0
          %v880 = vsel %vm465, %v800, 0
          %882 = vmatprep.subr.mxu0 0.0
          %883 = vmatpush1.msra.mxu0 %v801
          %884 = vmatprep.subr.mxu0 0.0
          %885 = vmatpush1.msra.mxu0 %v802
          %886 = vmatprep.subr.mxu0 0.0
          %887 = vmatpush1.msra.mxu0 0.0
          %888 = vmatprep.subr.mxu0 0.0
          %889 = vmatpush1.msra.mxu0 0.0
          %890 = vmatprep.subr.mxu0 0.0
          %891 = vmatpush1.msra.mxu0 0.0
          %892 = vmatprep.subr.mxu0 0.0
          %893 = vmatpush1.msra.mxu0 0.0
          %894 = vmatprep.subr.mxu0 0.0
          %895 = vmatpush1.msra.mxu0 0.0
          %896 = vmatprep.subr.mxu0 0.0
          %897 = vmatpush1.msra.mxu0 0.0
          %898 = vmatprep.subr.mxu0 0.0
          %899 = vmatpush1.msra.mxu0 0.0
          %900 = vmatprep.subr.mxu0 0.0
          %901 = vmatpush1.msra.mxu0 0.0
          %902 = vmatprep.subr.mxu0 0.0
          %903 = vmatpush1.msra.mxu0 0.0
          %904 = vmatprep.subr.mxu0 0.0
          %905 = vmatpush1.msra.mxu0 0.0
          %906 = vmatprep.subr.mxu0 0.0
          %907 = vmatpush1.msra.mxu0 0.0
          %908 = vmatprep.subr.mxu0 0.0
          %909 = vmatpush1.msra.mxu0 0.0
          %910 = vmatprep.subr.mxu0 0.0
          %911 = vmatpush1.msra.mxu0 0.0
          %912 = vmatprep.subr.mxu0 0.0
          %913 = vmatpush1.msra.mxu0 0.0
          %914 = vmatprep.subr.mxu0 0.0
          %915 = vmatpush1.msra.mxu0 0.0
          %916 = vmatprep.subr.mxu0 0.0
          %917 = vmatpush1.msra.mxu0 0.0
          %918 = vmatprep.subr.mxu0 0.0
          %919 = vmatpush1.msra.mxu0 0.0
          %920 = vmatprep.subr.mxu0 0.0
          %921 = vmatpush1.msra.mxu0 0.0
          %922 = vmatprep.subr.mxu0 0.0
          %923 = vmatpush1.msra.mxu0 0.0
          %924 = vmatprep.subr.mxu0 0.0
          %925 = vmatpush1.msra.mxu0 0.0
          %926 = vmatprep.subr.mxu0 0.0
          %927 = vmatpush1.msra.mxu0 0.0
          %928 = vmatprep.subr.mxu0 0.0
          %929 = vmatpush1.msra.mxu0 0.0
          %930 = vmatprep.subr.mxu0 0.0
          %931 = vmatpush1.msra.mxu0 0.0
          %932 = vmatprep.subr.mxu0 0.0
          %933 = vmatpush1.msra.mxu0 0.0
          %934 = vmatprep.subr.mxu0 0.0
          %935 = vmatpush1.msra.mxu0 0.0
          %936 = vmatprep.subr.mxu0 0.0
          %937 = vmatpush1.msra.mxu0 0.0
          %938 = vmatprep.subr.mxu0 0.0
          %939 = vmatpush1.msra.mxu0 0.0
          %940 = vmatprep.subr.mxu0 0.0
          %941 = vmatpush1.msra.mxu0 0.0
          %942 = vmatprep.subr.mxu0 0.0
          %943 = vmatpush1.msra.mxu0 0.0
          %944 = vmatprep.subr.mxu0 0.0
          %945 = vmatpush1.msra.mxu0 0.0
          %946 = vmatprep.mubr.f32.mxu0 0.0
          %947 = vmatmul.mubr.f32.gmra.mrb[0].mxu0 %v880
          %v948 = vpop.f32.mrb[0].mxu0
          %v949 = vadd.f32 %v876, %v948
          %v950 = vpop.f32.mrb[0].mxu0
          %951 = vdwg.mxu0
          %v952 = vld [vmem:[%s4 + $0x1] sm:$0x1]
          %v954 = vlaneseq
          %v955 = vshrl.u32 %v954, 7
          %v956 = vsub.s32 0, %v955
          %v957 = vrot.slane %v952, %v956
          %v959 = vadd.f32 %v949, %v957
          %vm960 = vcmp.gt.f32.partialorder %v959, 0.0
          %v961 = vmul.f32 %v959, 0.1
          %v962 = vsel %vm960, %v959, %v961
          %963 = vst [vmem:[#allocation3] sm:$0xff] %v962
          %v964 = vld [vmem:[#allocation2] sm:$0xff]
          %v965 = vld [vmem:[#allocation15] sm:$0xff]
          %v966 = vld [vmem:[#allocation15 + $0x8] sm:$0xff]
          %v967 = vld [vmem:[#allocation15 + $0x10] sm:$0xff]
          %v968 = vld [vmem:[#allocation15 + $0x18] sm:$0xff]
          %v969 = vld [vmem:[#allocation15 + $0x20] sm:$0xff]
          %v970 = vld [vmem:[#allocation15 + $0x28] sm:$0xff]
          %v971 = vld [vmem:[#allocation15 + $0x30] sm:$0xff]
          %v972 = vld [vmem:[#allocation15 + $0x38] sm:$0xff]
          %v973 = vld [vmem:[#allocation15 + $0x40] sm:$0xff]
          %v974 = vld [vmem:[#allocation15 + $0x48] sm:$0xff]
          %v975 = vld [vmem:[#allocation15 + $0x50] sm:$0xff]
          %v976 = vld [vmem:[#allocation15 + $0x58] sm:$0xff]
          %v977 = vld [vmem:[#allocation15 + $0x60] sm:$0xff]
          %v978 = vld [vmem:[#allocation15 + $0x68] sm:$0xff]
          %v979 = vld [vmem:[#allocation15 + $0x70] sm:$0xff]
          %v980 = vld [vmem:[#allocation15 + $0x78] sm:$0xff]
          %981 = vmatprep.subr.mxu0 0.0
          %982 = vmatpush1.msra.mxu0 %v965
          %983 = vmatprep.subr.mxu0 0.0
          %984 = vmatpush1.msra.mxu0 %v966
          %985 = vmatprep.subr.mxu0 0.0
          %986 = vmatpush1.msra.mxu0 %v967
          %987 = vmatprep.subr.mxu0 0.0
          %988 = vmatpush1.msra.mxu0 %v968
          %989 = vmatprep.subr.mxu0 0.0
          %990 = vmatpush1.msra.mxu0 %v969
          %991 = vmatprep.subr.mxu0 0.0
          %992 = vmatpush1.msra.mxu0 %v970
          %993 = vmatprep.subr.mxu0 0.0
          %994 = vmatpush1.msra.mxu0 %v971
          %995 = vmatprep.subr.mxu0 0.0
          %996 = vmatpush1.msra.mxu0 %v972
          %997 = vmatprep.subr.mxu0 0.0
          %998 = vmatpush1.msra.mxu0 %v973
          %999 = vmatprep.subr.mxu0 0.0
          %1000 = vmatpush1.msra.mxu0 %v974
          %1001 = vmatprep.subr.mxu0 0.0
          %1002 = vmatpush1.msra.mxu0 %v975
          %1003 = vmatprep.subr.mxu0 0.0
          %1004 = vmatpush1.msra.mxu0 %v976
          %1005 = vmatprep.subr.mxu0 0.0
          %1006 = vmatpush1.msra.mxu0 %v977
          %1007 = vmatprep.subr.mxu0 0.0
          %1008 = vmatpush1.msra.mxu0 %v978
          %1009 = vmatprep.subr.mxu0 0.0
          %1010 = vmatpush1.msra.mxu0 %v979
          %1011 = vmatprep.subr.mxu0 0.0
          %1012 = vmatpush1.msra.mxu0 %v980
          %1013 = vmatprep.subr.mxu0 0.0
          %1014 = vmatpush1.msra.mxu0 0.0
          %1015 = vmatprep.subr.mxu0 0.0
          %1016 = vmatpush1.msra.mxu0 0.0
          %1017 = vmatprep.subr.mxu0 0.0
          %1018 = vmatpush1.msra.mxu0 0.0
          %1019 = vmatprep.subr.mxu0 0.0
          %1020 = vmatpush1.msra.mxu0 0.0
          %1021 = vmatprep.subr.mxu0 0.0
          %1022 = vmatpush1.msra.mxu0 0.0
          %1023 = vmatprep.subr.mxu0 0.0
          %1024 = vmatpush1.msra.mxu0 0.0
          %1025 = vmatprep.subr.mxu0 0.0
          %1026 = vmatpush1.msra.mxu0 0.0
          %1027 = vmatprep.subr.mxu0 0.0
          %1028 = vmatpush1.msra.mxu0 0.0
          %1029 = vmatprep.subr.mxu0 0.0
          %1030 = vmatpush1.msra.mxu0 0.0
          %1031 = vmatprep.subr.mxu0 0.0
          %1032 = vmatpush1.msra.mxu0 0.0
          %1033 = vmatprep.subr.mxu0 0.0
          %1034 = vmatpush1.msra.mxu0 0.0
          %1035 = vmatprep.subr.mxu0 0.0
          %1036 = vmatpush1.msra.mxu0 0.0
          %1037 = vmatprep.subr.mxu0 0.0
          %1038 = vmatpush1.msra.mxu0 0.0
          %1039 = vmatprep.subr.mxu0 0.0
          %1040 = vmatpush1.msra.mxu0 0.0
          %1041 = vmatprep.subr.mxu0 0.0
          %1042 = vmatpush1.msra.mxu0 0.0
          %1043 = vmatprep.subr.mxu0 0.0
          %1044 = vmatpush1.msra.mxu0 0.0
          %1045 = vmatprep.mubr.f32.mxu0 0.0
          %1046 = vmatmul.mubr.f32.gmra.mrb[0].mxu0 %v964
          %v1047 = vpop.f32.mrb[0].mxu0
          %v1048 = vadd.f32 0.0, %v1047
          %v1049 = vpop.f32.mrb[0].mxu0
          %1050 = vdwg.mxu0
          %1051 = vst [vmem:[#allocation4] sm:$0xff] %v1048
          %v1052 = vld [vmem:[#allocation4] sm:$0xff]
          %v1053 = vld [vmem:[#allocation3] sm:$0xff]
          %1054 = vmatprep.subr.mxu0 0.0
          %1055 = vmatpush1.xpose.msra.mxu0 %v1053
          %1056 = vmatprep.subr.mxu0 0.0
          %1057 = vmatpush1.xpose.msra.mxu0 0.0
          %1058 = vmatprep.subr.mxu0 0.0
          %1059 = vmatpush1.xpose.msra.mxu0 0.0
          %1060 = vmatprep.subr.mxu0 0.0
          %1061 = vmatpush1.xpose.msra.mxu0 0.0
          %1062 = vmatprep.subr.mxu0 0.0
          %1063 = vmatpush1.xpose.msra.mxu0 0.0
          %1064 = vmatprep.subr.mxu0 0.0
          %1065 = vmatpush1.xpose.msra.mxu0 0.0
          %1066 = vmatprep.subr.mxu0 0.0
          %1067 = vmatpush1.xpose.msra.mxu0 0.0
          %1068 = vmatprep.subr.mxu0 0.0
          %1069 = vmatpush1.xpose.msra.mxu0 0.0
          %1070 = vmatprep.subr.mxu0 0.0
          %1071 = vmatpush1.xpose.msra.mxu0 0.0
          %1072 = vmatprep.subr.mxu0 0.0
          %1073 = vmatpush1.xpose.msra.mxu0 0.0
          %1074 = vmatprep.subr.mxu0 0.0
          %1075 = vmatpush1.xpose.msra.mxu0 0.0
          %1076 = vmatprep.subr.mxu0 0.0
          %1077 = vmatpush1.xpose.msra.mxu0 0.0
          %1078 = vmatprep.subr.mxu0 0.0
          %1079 = vmatpush1.xpose.msra.mxu0 0.0
          %1080 = vmatprep.subr.mxu0 0.0
          %1081 = vmatpush1.xpose.msra.mxu0 0.0
          %1082 = vmatprep.subr.mxu0 0.0
          %1083 = vmatpush1.xpose.msra.mxu0 0.0
          %1084 = vmatprep.subr.mxu0 0.0
          %1085 = vmatpush1.xpose.msra.mxu0 0.0
          %1086 = vmatprep.subr.mxu0 0.0
          %1087 = vmatpush1.xpose.msra.mxu0 0.0
          %1088 = vmatprep.subr.mxu0 0.0
          %1089 = vmatpush1.xpose.msra.mxu0 0.0
          %1090 = vmatprep.subr.mxu0 0.0
          %1091 = vmatpush1.xpose.msra.mxu0 0.0
          %1092 = vmatprep.subr.mxu0 0.0
          %1093 = vmatpush1.xpose.msra.mxu0 0.0
          %1094 = vmatprep.subr.mxu0 0.0
          %1095 = vmatpush1.xpose.msra.mxu0 0.0
          %1096 = vmatprep.subr.mxu0 0.0
          %1097 = vmatpush1.xpose.msra.mxu0 0.0
          %1098 = vmatprep.subr.mxu0 0.0
          %1099 = vmatpush1.xpose.msra.mxu0 0.0
          %1100 = vmatprep.subr.mxu0 0.0
          %1101 = vmatpush1.xpose.msra.mxu0 0.0
          %1102 = vmatprep.subr.mxu0 0.0
          %1103 = vmatpush1.xpose.msra.mxu0 0.0
          %1104 = vmatprep.subr.mxu0 0.0
          %1105 = vmatpush1.xpose.msra.mxu0 0.0
          %1106 = vmatprep.subr.mxu0 0.0
          %1107 = vmatpush1.xpose.msra.mxu0 0.0
          %1108 = vmatprep.subr.mxu0 0.0
          %1109 = vmatpush1.xpose.msra.mxu0 0.0
          %1110 = vmatprep.subr.mxu0 0.0
          %1111 = vmatpush1.xpose.msra.mxu0 0.0
          %1112 = vmatprep.subr.mxu0 0.0
          %1113 = vmatpush1.xpose.msra.mxu0 0.0
          %1114 = vmatprep.subr.mxu0 0.0
          %1115 = vmatpush1.xpose.msra.mxu0 0.0
          %1116 = vmatprep.subr.mxu0 0.0
          %1117 = vmatpush1.xpose.msra.mxu0 0.0
          %1118 = vmatprep.mubr.f32.mxu0 0.0
          %1119 = vmatmul.mubr.f32.gmra.mrb[0].mxu0 %v1052
          %v1120 = vpop.f32.mrb[0].mxu0
          %v1121 = vadd.f32 0.0, %v1120
          %v1122 = vpop.f32.mrb[0].mxu0
          %1123 = vdwg.mxu0
          %vm1124 = vcmask 64512
          %1125 = vst.msk [vmem:[%s441] sm:$0xff] %vm1124, %v1121
        $region76: #{tpu_custom_call.1} parent=47 // pred_fallthru
          _
        %v1126 = vld [vmem:[#allocation5] sm:$0xff]
        %v1127 = vld [vmem:[#allocation16] sm:$0xff]
        %v1128 = vld [vmem:[#allocation16 + $0x8] sm:$0xff]
        %v1129 = vld [vmem:[#allocation16 + $0x40] sm:$0xff]
        %v1130 = vld [vmem:[#allocation16 + $0x48] sm:$0xff]
        %v1131 = vld [vmem:[#allocation16 + $0x80] sm:$0xff]
        %v1132 = vld [vmem:[#allocation16 + $0x88] sm:$0xff]
        %v1133 = vld [vmem:[#allocation16 + $0xc0] sm:$0xff]
        %v1134 = vld [vmem:[#allocation16 + $0xc8] sm:$0xff]
        %v1135 = vld [vmem:[#allocation16 + $0x100] sm:$0xff]
        %v1136 = vld [vmem:[#allocation16 + $0x108] sm:$0xff]
        %v1137 = vld [vmem:[#allocation16 + $0x140] sm:$0xff]
        %v1138 = vld [vmem:[#allocation16 + $0x148] sm:$0xff]
        %v1139 = vld [vmem:[#allocation16 + $0x180] sm:$0xff]
        %v1140 = vld [vmem:[#allocation16 + $0x188] sm:$0xff]
        %v1141 = vld [vmem:[#allocation16 + $0x1c0] sm:$0xff]
        %v1142 = vld [vmem:[#allocation16 + $0x1c8] sm:$0xff]
        %v1143 = vld [vmem:[#allocation16 + $0x200] sm:$0xff]
        %v1144 = vld [vmem:[#allocation16 + $0x208] sm:$0xff]
        %v1145 = vld [vmem:[#allocation16 + $0x240] sm:$0xff]
        %v1146 = vld [vmem:[#allocation16 + $0x248] sm:$0xff]
        %v1147 = vld [vmem:[#allocation16 + $0x280] sm:$0xff]
        %v1148 = vld [vmem:[#allocation16 + $0x288] sm:$0xff]
        %v1149 = vld [vmem:[#allocation16 + $0x2c0] sm:$0xff]
        %v1150 = vld [vmem:[#allocation16 + $0x2c8] sm:$0xff]
        %v1151 = vld [vmem:[#allocation16 + $0x300] sm:$0xff]
        %v1152 = vld [vmem:[#allocation16 + $0x308] sm:$0xff]
        %v1153 = vld [vmem:[#allocation16 + $0x340] sm:$0xff]
        %v1154 = vld [vmem:[#allocation16 + $0x348] sm:$0xff]
        %v1155 = vld [vmem:[#allocation16 + $0x380] sm:$0xff]
        %v1156 = vld [vmem:[#allocation16 + $0x388] sm:$0xff]
        %v1157 = vld [vmem:[#allocation16 + $0x3c0] sm:$0xff]
        %v1158 = vld [vmem:[#allocation16 + $0x3c8] sm:$0xff]
        %1159 = vmatprep.subr.mxu0 %v1128
        %1160 = vmatpush1.msra.mxu0 %v1127
        %1161 = vmatprep.subr.mxu0 %v1130
        %1162 = vmatpush1.msra.mxu0 %v1129
        %1163 = vmatprep.subr.mxu0 %v1132
        %1164 = vmatpush1.msra.mxu0 %v1131
        %1165 = vmatprep.subr.mxu0 %v1134
        %1166 = vmatpush1.msra.mxu0 %v1133
        %1167 = vmatprep.subr.mxu0 %v1136
        %1168 = vmatpush1.msra.mxu0 %v1135
        %1169 = vmatprep.subr.mxu0 %v1138
        %1170 = vmatpush1.msra.mxu0 %v1137
        %1171 = vmatprep.subr.mxu0 %v1140
        %1172 = vmatpush1.msra.mxu0 %v1139
        %1173 = vmatprep.subr.mxu0 %v1142
        %1174 = vmatpush1.msra.mxu0 %v1141
        %1175 = vmatprep.subr.mxu0 %v1144
        %1176 = vmatpush1.msra.mxu0 %v1143
        %1177 = vmatprep.subr.mxu0 %v1146
        %1178 = vmatpush1.msra.mxu0 %v1145
        %1179 = vmatprep.subr.mxu0 %v1148
        %1180 = vmatpush1.msra.mxu0 %v1147
        %1181 = vmatprep.subr.mxu0 %v1150
        %1182 = vmatpush1.msra.mxu0 %v1149
        %1183 = vmatprep.subr.mxu0 %v1152
        %1184 = vmatpush1.msra.mxu0 %v1151
        %1185 = vmatprep.subr.mxu0 %v1154
        %1186 = vmatpush1.msra.mxu0 %v1153
        %1187 = vmatprep.subr.mxu0 %v1156
        %1188 = vmatpush1.msra.mxu0 %v1155
        %1189 = vmatprep.subr.mxu0 %v1158
        %1190 = vmatpush1.msra.mxu0 %v1157
        %1191 = vmatprep.subr.mxu0 0.0
        %1192 = vmatpush1.msra.mxu0 0.0
        %1193 = vmatprep.subr.mxu0 0.0
        %1194 = vmatpush1.msra.mxu0 0.0
        %1195 = vmatprep.subr.mxu0 0.0
        %1196 = vmatpush1.msra.mxu0 0.0
        %1197 = vmatprep.subr.mxu0 0.0
        %1198 = vmatpush1.msra.mxu0 0.0
        %1199 = vmatprep.subr.mxu0 0.0
        %1200 = vmatpush1.msra.mxu0 0.0
        %1201 = vmatprep.subr.mxu0 0.0
        %1202 = vmatpush1.msra.mxu0 0.0
        %1203 = vmatprep.subr.mxu0 0.0
        %1204 = vmatpush1.msra.mxu0 0.0
        %1205 = vmatprep.subr.mxu0 0.0
        %1206 = vmatpush1.msra.mxu0 0.0
        %1207 = vmatprep.subr.mxu0 0.0
        %1208 = vmatpush1.msra.mxu0 0.0
        %1209 = vmatprep.subr.mxu0 0.0
        %1210 = vmatpush1.msra.mxu0 0.0
        %1211 = vmatprep.subr.mxu0 0.0
        %1212 = vmatpush1.msra.mxu0 0.0
        %1213 = vmatprep.subr.mxu0 0.0
        %1214 = vmatpush1.msra.mxu0 0.0
        %1215 = vmatprep.subr.mxu0 0.0
        %1216 = vmatpush1.msra.mxu0 0.0
        %1217 = vmatprep.subr.mxu0 0.0
        %1218 = vmatpush1.msra.mxu0 0.0
        %1219 = vmatprep.subr.mxu0 0.0
        %1220 = vmatpush1.msra.mxu0 0.0
        %1221 = vmatprep.subr.mxu0 0.0
        %1222 = vmatpush1.msra.mxu0 0.0
        %1223 = vmatprep.mubr.f32.mxu0 0.0
        %1224 = vmatmul.mubr.f32.gmra.mrb[0].mxu0 %v1126
        %v1225 = vpop.f32.mrb[0].mxu0
        %v1226 = vadd.f32 0.0, %v1225
        %v1227 = vpop.f32.mrb[0].mxu0
        %v1228 = vadd.f32 0.0, %v1227
        %1229 = vdwg.mxu0
        %1230 = vst [vmem:[#allocation6] sm:$0xff] %v1226
        %1231 = vst [vmem:[#allocation6 + $0x8] sm:$0xff] %v1228
        %v1232 = vld [vmem:[#allocation16 + $0x10] sm:$0xff]
        %v1233 = vld [vmem:[#allocation16 + $0x18] sm:$0xff]
        %v1234 = vld [vmem:[#allocation16 + $0x50] sm:$0xff]
        %v1235 = vld [vmem:[#allocation16 + $0x58] sm:$0xff]
        %v1236 = vld [vmem:[#allocation16 + $0x90] sm:$0xff]
        %v1237 = vld [vmem:[#allocation16 + $0x98] sm:$0xff]
        %v1238 = vld [vmem:[#allocation16 + $0xd0] sm:$0xff]
        %v1239 = vld [vmem:[#allocation16 + $0xd8] sm:$0xff]
        %v1240 = vld [vmem:[#allocation16 + $0x110] sm:$0xff]
        %v1241 = vld [vmem:[#allocation16 + $0x118] sm:$0xff]
        %v1242 = vld [vmem:[#allocation16 + $0x150] sm:$0xff]
        %v1243 = vld [vmem:[#allocation16 + $0x158] sm:$0xff]
        %v1244 = vld [vmem:[#allocation16 + $0x190] sm:$0xff]
        %v1245 = vld [vmem:[#allocation16 + $0x198] sm:$0xff]
        %v1246 = vld [vmem:[#allocation16 + $0x1d0] sm:$0xff]
        %v1247 = vld [vmem:[#allocation16 + $0x1d8] sm:$0xff]
        %v1248 = vld [vmem:[#allocation16 + $0x210] sm:$0xff]
        %v1249 = vld [vmem:[#allocation16 + $0x218] sm:$0xff]
        %v1250 = vld [vmem:[#allocation16 + $0x250] sm:$0xff]
        %v1251 = vld [vmem:[#allocation16 + $0x258] sm:$0xff]
        %v1252 = vld [vmem:[#allocation16 + $0x290] sm:$0xff]
        %v1253 = vld [vmem:[#allocation16 + $0x298] sm:$0xff]
        %v1254 = vld [vmem:[#allocation16 + $0x2d0] sm:$0xff]
        %v1255 = vld [vmem:[#allocation16 + $0x2d8] sm:$0xff]
        %v1256 = vld [vmem:[#allocation16 + $0x310] sm:$0xff]
        %v1257 = vld [vmem:[#allocation16 + $0x318] sm:$0xff]
        %v1258 = vld [vmem:[#allocation16 + $0x350] sm:$0xff]
        %v1259 = vld [vmem:[#allocation16 + $0x358] sm:$0xff]
        %v1260 = vld [vmem:[#allocation16 + $0x390] sm:$0xff]
        %v1261 = vld [vmem:[#allocation16 + $0x398] sm:$0xff]
        %v1262 = vld [vmem:[#allocation16 + $0x3d0] sm:$0xff]
        %v1263 = vld [vmem:[#allocation16 + $0x3d8] sm:$0xff]
        %1264 = vmatprep.subr.mxu0 %v1233
        %1265 = vmatpush1.msra.mxu0 %v1232
        %1266 = vmatprep.subr.mxu0 %v1235
        %1267 = vmatpush1.msra.mxu0 %v1234
        %1268 = vmatprep.subr.mxu0 %v1237
        %1269 = vmatpush1.msra.mxu0 %v1236
        %1270 = vmatprep.subr.mxu0 %v1239
        %1271 = vmatpush1.msra.mxu0 %v1238
        %1272 = vmatprep.subr.mxu0 %v1241
        %1273 = vmatpush1.msra.mxu0 %v1240
        %1274 = vmatprep.subr.mxu0 %v1243
        %1275 = vmatpush1.msra.mxu0 %v1242
        %1276 = vmatprep.subr.mxu0 %v1245
        %1277 = vmatpush1.msra.mxu0 %v1244
        %1278 = vmatprep.subr.mxu0 %v1247
        %1279 = vmatpush1.msra.mxu0 %v1246
        %1280 = vmatprep.subr.mxu0 %v1249
        %1281 = vmatpush1.msra.mxu0 %v1248
        %1282 = vmatprep.subr.mxu0 %v1251
        %1283 = vmatpush1.msra.mxu0 %v1250
        %1284 = vmatprep.subr.mxu0 %v1253
        %1285 = vmatpush1.msra.mxu0 %v1252
        %1286 = vmatprep.subr.mxu0 %v1255
        %1287 = vmatpush1.msra.mxu0 %v1254
        %1288 = vmatprep.subr.mxu0 %v1257
        %1289 = vmatpush1.msra.mxu0 %v1256
        %1290 = vmatprep.subr.mxu0 %v1259
        %1291 = vmatpush1.msra.mxu0 %v1258
        %1292 = vmatprep.subr.mxu0 %v1261
        %1293 = vmatpush1.msra.mxu0 %v1260
        %1294 = vmatprep.subr.mxu0 %v1263
        %1295 = vmatpush1.msra.mxu0 %v1262
        %1296 = vmatprep.subr.mxu0 0.0
        %1297 = vmatpush1.msra.mxu0 0.0
        %1298 = vmatprep.subr.mxu0 0.0
        %1299 = vmatpush1.msra.mxu0 0.0
        %1300 = vmatprep.subr.mxu0 0.0
        %1301 = vmatpush1.msra.mxu0 0.0
        %1302 = vmatprep.subr.mxu0 0.0
        %1303 = vmatpush1.msra.mxu0 0.0
        %1304 = vmatprep.subr.mxu0 0.0
        %1305 = vmatpush1.msra.mxu0 0.0
        %1306 = vmatprep.subr.mxu0 0.0
        %1307 = vmatpush1.msra.mxu0 0.0
        %1308 = vmatprep.subr.mxu0 0.0
        %1309 = vmatpush1.msra.mxu0 0.0
        %1310 = vmatprep.subr.mxu0 0.0
        %1311 = vmatpush1.msra.mxu0 0.0
        %1312 = vmatprep.subr.mxu0 0.0
        %1313 = vmatpush1.msra.mxu0 0.0
        %1314 = vmatprep.subr.mxu0 0.0
        %1315 = vmatpush1.msra.mxu0 0.0
        %1316 = vmatprep.subr.mxu0 0.0
        %1317 = vmatpush1.msra.mxu0 0.0
        %1318 = vmatprep.subr.mxu0 0.0
        %1319 = vmatpush1.msra.mxu0 0.0
        %1320 = vmatprep.subr.mxu0 0.0
        %1321 = vmatpush1.msra.mxu0 0.0
        %1322 = vmatprep.subr.mxu0 0.0
        %1323 = vmatpush1.msra.mxu0 0.0
        %1324 = vmatprep.subr.mxu0 0.0
        %1325 = vmatpush1.msra.mxu0 0.0
        %1326 = vmatprep.subr.mxu0 0.0
        %1327 = vmatpush1.msra.mxu0 0.0
        %1328 = vmatprep.mubr.f32.mxu0 0.0
        %1329 = vmatmul.mubr.f32.gmra.mrb[0].mxu0 %v1126
        %v1330 = vpop.f32.mrb[0].mxu0
        %v1331 = vadd.f32 0.0, %v1330
        %v1332 = vpop.f32.mrb[0].mxu0
        %v1333 = vadd.f32 0.0, %v1332
        %1334 = vdwg.mxu0
        %1335 = vst [vmem:[#allocation6 + $0x10] sm:$0xff] %v1331
        %1336 = vst [vmem:[#allocation6 + $0x18] sm:$0xff] %v1333
        %v1337 = vld [vmem:[#allocation16 + $0x20] sm:$0xff]
        %v1338 = vld [vmem:[#allocation16 + $0x28] sm:$0xff]
        %v1339 = vld [vmem:[#allocation16 + $0x60] sm:$0xff]
        %v1340 = vld [vmem:[#allocation16 + $0x68] sm:$0xff]
        %v1341 = vld [vmem:[#allocation16 + $0xa0] sm:$0xff]
        %v1342 = vld [vmem:[#allocation16 + $0xa8] sm:$0xff]
        %v1343 = vld [vmem:[#allocation16 + $0xe0] sm:$0xff]
        %v1344 = vld [vmem:[#allocation16 + $0xe8] sm:$0xff]
        %v1345 = vld [vmem:[#allocation16 + $0x120] sm:$0xff]
        %v1346 = vld [vmem:[#allocation16 + $0x128] sm:$0xff]
        %v1347 = vld [vmem:[#allocation16 + $0x160] sm:$0xff]
        %v1348 = vld [vmem:[#allocation16 + $0x168] sm:$0xff]
        %v1349 = vld [vmem:[#allocation16 + $0x1a0] sm:$0xff]
        %v1350 = vld [vmem:[#allocation16 + $0x1a8] sm:$0xff]
        %v1351 = vld [vmem:[#allocation16 + $0x1e0] sm:$0xff]
        %v1352 = vld [vmem:[#allocation16 + $0x1e8] sm:$0xff]
        %v1353 = vld [vmem:[#allocation16 + $0x220] sm:$0xff]
        %v1354 = vld [vmem:[#allocation16 + $0x228] sm:$0xff]
        %v1355 = vld [vmem:[#allocation16 + $0x260] sm:$0xff]
        %v1356 = vld [vmem:[#allocation16 + $0x268] sm:$0xff]
        %v1357 = vld [vmem:[#allocation16 + $0x2a0] sm:$0xff]
        %v1358 = vld [vmem:[#allocation16 + $0x2a8] sm:$0xff]
        %v1359 = vld [vmem:[#allocation16 + $0x2e0] sm:$0xff]
        %v1360 = vld [vmem:[#allocation16 + $0x2e8] sm:$0xff]
        %v1361 = vld [vmem:[#allocation16 + $0x320] sm:$0xff]
        %v1362 = vld [vmem:[#allocation16 + $0x328] sm:$0xff]
        %v1363 = vld [vmem:[#allocation16 + $0x360] sm:$0xff]
        %v1364 = vld [vmem:[#allocation16 + $0x368] sm:$0xff]
        %v1365 = vld [vmem:[#allocation16 + $0x3a0] sm:$0xff]
        %v1366 = vld [vmem:[#allocation16 + $0x3a8] sm:$0xff]
        %v1367 = vld [vmem:[#allocation16 + $0x3e0] sm:$0xff]
        %v1368 = vld [vmem:[#allocation16 + $0x3e8] sm:$0xff]
        %1369 = vmatprep.subr.mxu0 %v1338
        %1370 = vmatpush1.msra.mxu0 %v1337
        %1371 = vmatprep.subr.mxu0 %v1340
        %1372 = vmatpush1.msra.mxu0 %v1339
        %1373 = vmatprep.subr.mxu0 %v1342
        %1374 = vmatpush1.msra.mxu0 %v1341
        %1375 = vmatprep.subr.mxu0 %v1344
        %1376 = vmatpush1.msra.mxu0 %v1343
        %1377 = vmatprep.subr.mxu0 %v1346
        %1378 = vmatpush1.msra.mxu0 %v1345
        %1379 = vmatprep.subr.mxu0 %v1348
        %1380 = vmatpush1.msra.mxu0 %v1347
        %1381 = vmatprep.subr.mxu0 %v1350
        %1382 = vmatpush1.msra.mxu0 %v1349
        %1383 = vmatprep.subr.mxu0 %v1352
        %1384 = vmatpush1.msra.mxu0 %v1351
        %1385 = vmatprep.subr.mxu0 %v1354
        %1386 = vmatpush1.msra.mxu0 %v1353
        %1387 = vmatprep.subr.mxu0 %v1356
        %1388 = vmatpush1.msra.mxu0 %v1355
        %1389 = vmatprep.subr.mxu0 %v1358
        %1390 = vmatpush1.msra.mxu0 %v1357
        %1391 = vmatprep.subr.mxu0 %v1360
        %1392 = vmatpush1.msra.mxu0 %v1359
        %1393 = vmatprep.subr.mxu0 %v1362
        %1394 = vmatpush1.msra.mxu0 %v1361
        %1395 = vmatprep.subr.mxu0 %v1364
        %1396 = vmatpush1.msra.mxu0 %v1363
        %1397 = vmatprep.subr.mxu0 %v1366
        %1398 = vmatpush1.msra.mxu0 %v1365
        %1399 = vmatprep.subr.mxu0 %v1368
        %1400 = vmatpush1.msra.mxu0 %v1367
        %1401 = vmatprep.subr.mxu0 0.0
        %1402 = vmatpush1.msra.mxu0 0.0
        %1403 = vmatprep.subr.mxu0 0.0
        %1404 = vmatpush1.msra.mxu0 0.0
        %1405 = vmatprep.subr.mxu0 0.0
        %1406 = vmatpush1.msra.mxu0 0.0
        %1407 = vmatprep.subr.mxu0 0.0
        %1408 = vmatpush1.msra.mxu0 0.0
        %1409 = vmatprep.subr.mxu0 0.0
        %1410 = vmatpush1.msra.mxu0 0.0
        %1411 = vmatprep.subr.mxu0 0.0
        %1412 = vmatpush1.msra.mxu0 0.0
        %1413 = vmatprep.subr.mxu0 0.0
        %1414 = vmatpush1.msra.mxu0 0.0
        %1415 = vmatprep.subr.mxu0 0.0
        %1416 = vmatpush1.msra.mxu0 0.0
        %1417 = vmatprep.subr.mxu0 0.0
        %1418 = vmatpush1.msra.mxu0 0.0
        %1419 = vmatprep.subr.mxu0 0.0
        %1420 = vmatpush1.msra.mxu0 0.0
        %1421 = vmatprep.subr.mxu0 0.0
        %1422 = vmatpush1.msra.mxu0 0.0
        %1423 = vmatprep.subr.mxu0 0.0
        %1424 = vmatpush1.msra.mxu0 0.0
        %1425 = vmatprep.subr.mxu0 0.0
        %1426 = vmatpush1.msra.mxu0 0.0
        %1427 = vmatprep.subr.mxu0 0.0
        %1428 = vmatpush1.msra.mxu0 0.0
        %1429 = vmatprep.subr.mxu0 0.0
        %1430 = vmatpush1.msra.mxu0 0.0
        %1431 = vmatprep.subr.mxu0 0.0
        %1432 = vmatpush1.msra.mxu0 0.0
        %1433 = vmatprep.mubr.f32.mxu0 0.0
        %1434 = vmatmul.mubr.f32.gmra.mrb[0].mxu0 %v1126
        %v1435 = vpop.f32.mrb[0].mxu0
        %v1436 = vadd.f32 0.0, %v1435
        %v1437 = vpop.f32.mrb[0].mxu0
        %v1438 = vadd.f32 0.0, %v1437
        %1439 = vdwg.mxu0
        %1440 = vst [vmem:[#allocation6 + $0x20] sm:$0xff] %v1436
        %1441 = vst [vmem:[#allocation6 + $0x28] sm:$0xff] %v1438
        %v1442 = vld [vmem:[#allocation16 + $0x30] sm:$0xff]
        %v1443 = vld [vmem:[#allocation16 + $0x38] sm:$0xff]
        %v1444 = vld [vmem:[#allocation16 + $0x70] sm:$0xff]
        %v1445 = vld [vmem:[#allocation16 + $0x78] sm:$0xff]
        %v1446 = vld [vmem:[#allocation16 + $0xb0] sm:$0xff]
        %v1447 = vld [vmem:[#allocation16 + $0xb8] sm:$0xff]
        %v1448 = vld [vmem:[#allocation16 + $0xf0] sm:$0xff]
        %v1449 = vld [vmem:[#allocation16 + $0xf8] sm:$0xff]
        %v1450 = vld [vmem:[#allocation16 + $0x130] sm:$0xff]
        %v1451 = vld [vmem:[#allocation16 + $0x138] sm:$0xff]
        %v1452 = vld [vmem:[#allocation16 + $0x170] sm:$0xff]
        %v1453 = vld [vmem:[#allocation16 + $0x178] sm:$0xff]
        %v1454 = vld [vmem:[#allocation16 + $0x1b0] sm:$0xff]
        %v1455 = vld [vmem:[#allocation16 + $0x1b8] sm:$0xff]
        %v1456 = vld [vmem:[#allocation16 + $0x1f0] sm:$0xff]
        %v1457 = vld [vmem:[#allocation16 + $0x1f8] sm:$0xff]
        %v1458 = vld [vmem:[#allocation16 + $0x230] sm:$0xff]
        %v1459 = vld [vmem:[#allocation16 + $0x238] sm:$0xff]
        %v1460 = vld [vmem:[#allocation16 + $0x270] sm:$0xff]
        %v1461 = vld [vmem:[#allocation16 + $0x278] sm:$0xff]
        %v1462 = vld [vmem:[#allocation16 + $0x2b0] sm:$0xff]
        %v1463 = vld [vmem:[#allocation16 + $0x2b8] sm:$0xff]
        %v1464 = vld [vmem:[#allocation16 + $0x2f0] sm:$0xff]
        %v1465 = vld [vmem:[#allocation16 + $0x2f8] sm:$0xff]
        %v1466 = vld [vmem:[#allocation16 + $0x330] sm:$0xff]
        %v1467 = vld [vmem:[#allocation16 + $0x338] sm:$0xff]
        %v1468 = vld [vmem:[#allocation16 + $0x370] sm:$0xff]
        %v1469 = vld [vmem:[#allocation16 + $0x378] sm:$0xff]
        %v1470 = vld [vmem:[#allocation16 + $0x3b0] sm:$0xff]
        %v1471 = vld [vmem:[#allocation16 + $0x3b8] sm:$0xff]
        %v1472 = vld [vmem:[#allocation16 + $0x3f0] sm:$0xff]
        %v1473 = vld [vmem:[#allocation16 + $0x3f8] sm:$0xff]
        %1474 = vmatprep.subr.mxu0 %v1443
        %1475 = vmatpush1.msra.mxu0 %v1442
        %1476 = vmatprep.subr.mxu0 %v1445
        %1477 = vmatpush1.msra.mxu0 %v1444
        %1478 = vmatprep.subr.mxu0 %v1447
        %1479 = vmatpush1.msra.mxu0 %v1446
        %1480 = vmatprep.subr.mxu0 %v1449
        %1481 = vmatpush1.msra.mxu0 %v1448
        %1482 = vmatprep.subr.mxu0 %v1451
        %1483 = vmatpush1.msra.mxu0 %v1450
        %1484 = vmatprep.subr.mxu0 %v1453
        %1485 = vmatpush1.msra.mxu0 %v1452
        %1486 = vmatprep.subr.mxu0 %v1455
        %1487 = vmatpush1.msra.mxu0 %v1454
        %1488 = vmatprep.subr.mxu0 %v1457
        %1489 = vmatpush1.msra.mxu0 %v1456
        %1490 = vmatprep.subr.mxu0 %v1459
        %1491 = vmatpush1.msra.mxu0 %v1458
        %1492 = vmatprep.subr.mxu0 %v1461
        %1493 = vmatpush1.msra.mxu0 %v1460
        %1494 = vmatprep.subr.mxu0 %v1463
        %1495 = vmatpush1.msra.mxu0 %v1462
        %1496 = vmatprep.subr.mxu0 %v1465
        %1497 = vmatpush1.msra.mxu0 %v1464
        %1498 = vmatprep.subr.mxu0 %v1467
        %1499 = vmatpush1.msra.mxu0 %v1466
        %1500 = vmatprep.subr.mxu0 %v1469
        %1501 = vmatpush1.msra.mxu0 %v1468
        %1502 = vmatprep.subr.mxu0 %v1471
        %1503 = vmatpush1.msra.mxu0 %v1470
        %1504 = vmatprep.subr.mxu0 %v1473
        %1505 = vmatpush1.msra.mxu0 %v1472
        %1506 = vmatprep.subr.mxu0 0.0
        %1507 = vmatpush1.msra.mxu0 0.0
        %1508 = vmatprep.subr.mxu0 0.0
        %1509 = vmatpush1.msra.mxu0 0.0
        %1510 = vmatprep.subr.mxu0 0.0
        %1511 = vmatpush1.msra.mxu0 0.0
        %1512 = vmatprep.subr.mxu0 0.0
        %1513 = vmatpush1.msra.mxu0 0.0
        %1514 = vmatprep.subr.mxu0 0.0
        %1515 = vmatpush1.msra.mxu0 0.0
        %1516 = vmatprep.subr.mxu0 0.0
        %1517 = vmatpush1.msra.mxu0 0.0
        %1518 = vmatprep.subr.mxu0 0.0
        %1519 = vmatpush1.msra.mxu0 0.0
        %1520 = vmatprep.subr.mxu0 0.0
        %1521 = vmatpush1.msra.mxu0 0.0
        %1522 = vmatprep.subr.mxu0 0.0
        %1523 = vmatpush1.msra.mxu0 0.0
        %1524 = vmatprep.subr.mxu0 0.0
        %1525 = vmatpush1.msra.mxu0 0.0
        %1526 = vmatprep.subr.mxu0 0.0
        %1527 = vmatpush1.msra.mxu0 0.0
        %1528 = vmatprep.subr.mxu0 0.0
        %1529 = vmatpush1.msra.mxu0 0.0
        %1530 = vmatprep.subr.mxu0 0.0
        %1531 = vmatpush1.msra.mxu0 0.0
        %1532 = vmatprep.subr.mxu0 0.0
        %1533 = vmatpush1.msra.mxu0 0.0
        %1534 = vmatprep.subr.mxu0 0.0
        %1535 = vmatpush1.msra.mxu0 0.0
        %1536 = vmatprep.subr.mxu0 0.0
        %1537 = vmatpush1.msra.mxu0 0.0
        %1538 = vmatprep.mubr.f32.mxu0 0.0
        %1539 = vmatmul.mubr.f32.gmra.mrb[0].mxu0 %v1126
        %v1540 = vpop.f32.mrb[0].mxu0
        %v1541 = vadd.f32 0.0, %v1540
        %v1542 = vpop.f32.mrb[0].mxu0
        %v1543 = vadd.f32 0.0, %v1542
        %1544 = vdwg.mxu0
        %1545 = vst [vmem:[#allocation6 + $0x30] sm:$0xff] %v1541
        %1546 = vst [vmem:[#allocation6 + $0x38] sm:$0xff] %v1543
        %v1547 = vld [vmem:[#allocation6] sm:$0xff]
        %v1548 = vld [vmem:[#allocation6 + $0x8] sm:$0xff]
        %v1549 = vld [vmem:[#allocation6 + $0x10] sm:$0xff]
        %v1550 = vld [vmem:[#allocation6 + $0x18] sm:$0xff]
        %v1551 = vld [vmem:[#allocation6 + $0x20] sm:$0xff]
        %v1552 = vld [vmem:[#allocation6 + $0x28] sm:$0xff]
        %v1553 = vld [vmem:[#allocation6 + $0x30] sm:$0xff]
        %v1554 = vld [vmem:[#allocation6 + $0x38] sm:$0xff]
        %v1555 = vld [vmem:[#allocation5 + $0x8] sm:$0xff]
        %1556 = vmatprep.subr.mxu0 0.0
        %1557 = vmatpush1.xpose.msra.mxu0 %v1555
        %1558 = vmatprep.subr.mxu0 0.0
        %1559 = vmatpush1.xpose.msra.mxu0 0.0
        %1560 = vmatprep.subr.mxu0 0.0
        %1561 = vmatpush1.xpose.msra.mxu0 0.0
        %1562 = vmatprep.subr.mxu0 0.0
        %1563 = vmatpush1.xpose.msra.mxu0 0.0
        %1564 = vmatprep.subr.mxu0 0.0
        %1565 = vmatpush1.xpose.msra.mxu0 0.0
        %1566 = vmatprep.subr.mxu0 0.0
        %1567 = vmatpush1.xpose.msra.mxu0 0.0
        %1568 = vmatprep.subr.mxu0 0.0
        %1569 = vmatpush1.xpose.msra.mxu0 0.0
        %1570 = vmatprep.subr.mxu0 0.0
        %1571 = vmatpush1.xpose.msra.mxu0 0.0
        %1572 = vmatprep.subr.mxu0 0.0
        %1573 = vmatpush1.xpose.msra.mxu0 0.0
        %1574 = vmatprep.subr.mxu0 0.0
        %1575 = vmatpush1.xpose.msra.mxu0 0.0
        %1576 = vmatprep.subr.mxu0 0.0
        %1577 = vmatpush1.xpose.msra.mxu0 0.0
        %1578 = vmatprep.subr.mxu0 0.0
        %1579 = vmatpush1.xpose.msra.mxu0 0.0
        %1580 = vmatprep.subr.mxu0 0.0
        %1581 = vmatpush1.xpose.msra.mxu0 0.0
        %1582 = vmatprep.subr.mxu0 0.0
        %1583 = vmatpush1.xpose.msra.mxu0 0.0
        %1584 = vmatprep.subr.mxu0 0.0
        %1585 = vmatpush1.xpose.msra.mxu0 0.0
        %1586 = vmatprep.subr.mxu0 0.0
        %1587 = vmatpush1.xpose.msra.mxu0 0.0
        %1588 = vmatprep.subr.mxu0 0.0
        %1589 = vmatpush1.xpose.msra.mxu0 0.0
        %1590 = vmatprep.subr.mxu0 0.0
        %1591 = vmatpush1.xpose.msra.mxu0 0.0
        %1592 = vmatprep.subr.mxu0 0.0
        %1593 = vmatpush1.xpose.msra.mxu0 0.0
        %1594 = vmatprep.subr.mxu0 0.0
        %1595 = vmatpush1.xpose.msra.mxu0 0.0
        %1596 = vmatprep.subr.mxu0 0.0
        %1597 = vmatpush1.xpose.msra.mxu0 0.0
        %1598 = vmatprep.subr.mxu0 0.0
        %1599 = vmatpush1.xpose.msra.mxu0 0.0
        %1600 = vmatprep.subr.mxu0 0.0
        %1601 = vmatpush1.xpose.msra.mxu0 0.0
        %1602 = vmatprep.subr.mxu0 0.0
        %1603 = vmatpush1.xpose.msra.mxu0 0.0
        %1604 = vmatprep.subr.mxu0 0.0
        %1605 = vmatpush1.xpose.msra.mxu0 0.0
        %1606 = vmatprep.subr.mxu0 0.0
        %1607 = vmatpush1.xpose.msra.mxu0 0.0
        %1608 = vmatprep.subr.mxu0 0.0
        %1609 = vmatpush1.xpose.msra.mxu0 0.0
        %1610 = vmatprep.subr.mxu0 0.0
        %1611 = vmatpush1.xpose.msra.mxu0 0.0
        %1612 = vmatprep.subr.mxu0 0.0
        %1613 = vmatpush1.xpose.msra.mxu0 0.0
        %1614 = vmatprep.subr.mxu0 0.0
        %1615 = vmatpush1.xpose.msra.mxu0 0.0
        %1616 = vmatprep.subr.mxu0 0.0
        %1617 = vmatpush1.xpose.msra.mxu0 0.0
        %1618 = vmatprep.subr.mxu0 0.0
        %1619 = vmatpush1.xpose.msra.mxu0 0.0
        %1620 = vmatprep.mubr.f32.mxu0 0.0
        %1621 = vmatmul.mubr.f32.gmra.mrb[0].mxu0 %v1547
        %v1622 = vpop.f32.mrb[0].mxu0
        %v1623 = vadd.f32 0.0, %v1622
        %v1624 = vpop.f32.mrb[0].mxu0
        %1625 = vmatprep.mubr.f32.mxu0 0.0
        %1626 = vmatmul.mubr.f32.gmra.mrb[0].mxu0 %v1548
        %v1627 = vpop.f32.mrb[0].mxu0
        %v1628 = vadd.f32 0.0, %v1627
        %v1629 = vpop.f32.mrb[0].mxu0
        %1630 = vmatprep.mubr.f32.mxu0 0.0
        %1631 = vmatmul.mubr.f32.gmra.mrb[0].mxu0 %v1549
        %v1632 = vpop.f32.mrb[0].mxu0
        %v1633 = vadd.f32 0.0, %v1632
        %v1634 = vpop.f32.mrb[0].mxu0
        %1635 = vmatprep.mubr.f32.mxu0 0.0
        %1636 = vmatmul.mubr.f32.gmra.mrb[0].mxu0 %v1550
        %v1637 = vpop.f32.mrb[0].mxu0
        %v1638 = vadd.f32 0.0, %v1637
        %v1639 = vpop.f32.mrb[0].mxu0
        %1640 = vmatprep.mubr.f32.mxu0 0.0
        %1641 = vmatmul.mubr.f32.gmra.mrb[0].mxu0 %v1551
        %v1642 = vpop.f32.mrb[0].mxu0
        %v1643 = vadd.f32 0.0, %v1642
        %v1644 = vpop.f32.mrb[0].mxu0
        %1645 = vmatprep.mubr.f32.mxu0 0.0
        %1646 = vmatmul.mubr.f32.gmra.mrb[0].mxu0 %v1552
        %v1647 = vpop.f32.mrb[0].mxu0
        %v1648 = vadd.f32 0.0, %v1647
        %v1649 = vpop.f32.mrb[0].mxu0
        %1650 = vmatprep.mubr.f32.mxu0 0.0
        %1651 = vmatmul.mubr.f32.gmra.mrb[0].mxu0 %v1553
        %v1652 = vpop.f32.mrb[0].mxu0
        %v1653 = vadd.f32 0.0, %v1652
        %v1654 = vpop.f32.mrb[0].mxu0
        %1655 = vmatprep.mubr.f32.mxu0 0.0
        %1656 = vmatmul.mubr.f32.gmra.mrb[0].mxu0 %v1554
        %v1657 = vpop.f32.mrb[0].mxu0
        %v1658 = vadd.f32 0.0, %v1657
        %v1659 = vpop.f32.mrb[0].mxu0
        %1660 = vdwg.mxu0
        %vm1661 = vcmask 64512
        %1662 = vst.msk [vmem:[%s448] sm:$0xff] %vm1661, %v1623
        %1663 = vst.msk [vmem:[%s448 + $0x8] sm:$0xff] %vm1661, %v1628
        %1664 = vst.msk [vmem:[%s448 + $0x10] sm:$0xff] %vm1661, %v1633
        %1665 = vst.msk [vmem:[%s448 + $0x18] sm:$0xff] %vm1661, %v1638
        %1666 = vst.msk [vmem:[%s448 + $0x20] sm:$0xff] %vm1661, %v1643
        %1667 = vst.msk [vmem:[%s448 + $0x28] sm:$0xff] %vm1661, %v1648
        %1668 = vst.msk [vmem:[%s448 + $0x30] sm:$0xff] %vm1661, %v1653
        %1669 = vst.msk [vmem:[%s448 + $0x38] sm:$0xff] %vm1661, %v1658
        %s1670 = sand.u32 %s216, 1
        %s1671 = scalar_lea.sflag [#allocation9], %s1670
        %s1672 = sand.u32 %s216, 1
        %s1673 = smul.addr %s1672, 8
        %s1674 = scalar_lea.vmem [#allocation18], %s1673
        %s1675 = sand.u32 %s244, 1
        %s1676 = scalar_lea.sflag [#allocation20], %s1675
        %s1677 = sand.u32 %s244, 1
        %s1678 = smul.addr %s1677, 64
        %s1679 = scalar_lea.vmem [#allocation19], %s1678
        // Predicated region
        $region77: #{tpu_custom_call.1} parent=47 // pred_check
          %p1680 = pneg %p226
        $region78: #{tpu_custom_call.1} parent=47 // pred_check_branch
          %1682 = sbr.rel (%p1680) target = $region80
        $region79: #{tpu_custom_call.1} parent=47 // pred_region
          %s1684 = ssub.s32 128, 128
          %1685 = vsyncadd %s1671, %s1684
          %s1686 = smul.addr %s38, 128
          %s1687 = scalar_lea.hbm %s7, %s1686
          %s1689 = sshll.u32 %s1674, 4
          %s1690 = int_to_ptr.vmem [resolvable:$true] %s1689
          %1692 = dma.vmem_to_hbm [thread:$0]  %s1690, 128, %s1687, %s1671
        $region80: #{tpu_custom_call.1} parent=47 // pred_fallthru
          _
        // Predicated region
        $region81: #{tpu_custom_call.1} parent=47 // pred_check
          %p1693 = pneg %p254
        $region82: #{tpu_custom_call.1} parent=47 // pred_check_branch
          %1695 = sbr.rel (%p1693) target = $region84
        $region83: #{tpu_custom_call.1} parent=47 // pred_region
          %s1696 = smul.u32 8, %s39
          %s1698 = ssub.s32 1024, 1024
          %1699 = vsyncadd %s1676, %s1698
          %s1700 = smul.addr %s38, 8
          %s1701 = sadd.s32 %s1696, %s1700
          %s1702 = smul.addr %s1701, 128
          %s1703 = scalar_lea.hbm %s8, %s1702
          %s1704 = sshll.u32 %s1679, 4
          %s1705 = int_to_ptr.vmem [resolvable:$true] %s1704
          %1710 = dma.vmem_to_hbm [thread:$0]  %s1705, 1024, %s1703, %s1676, 128, 128, 8
        $region84: #{tpu_custom_call.1} parent=47 // pred_fallthru
          _
      $region48: #{tpu_custom_call.1} parent=5 // pred_fallthru
        _
      %p1711 = scmp.le.s32.totalorder 2, %s29
      // Predicated region
      $region85: #{tpu_custom_call.1} parent=5 // pred_check
        %p1712 = pneg %p1711
      $region86: #{tpu_custom_call.1} parent=5 // pred_check_branch
        %1714 = sbr.rel (%p1712) target = $region88
      $region87: #{tpu_custom_call.1} parent=5 // pred_region
        %s1715 = ssub.s32 %s29, 2
        // Predicated region
        $region89: #{tpu_custom_call.1} parent=87 // pred_check
          %p1716 = pneg %p232
        $region90: #{tpu_custom_call.1} parent=87 // pred_check_branch
          %1718 = sbr.rel (%p1716) target = $region92
        $region91: #{tpu_custom_call.1} parent=87 // pred_region
          %s1719 = sand.u32 %s217, 1
          %s1720 = scalar_lea.sflag [#allocation9], %s1719
          %s1721 = sand.u32 %s217, 1
          %s1722 = smul.addr %s1721, 8
          %s1723 = scalar_lea.vmem [#allocation18], %s1722
          %1724 = dma.done %s1720, 128
        $region92: #{tpu_custom_call.1} parent=87 // pred_fallthru
          _
        // Predicated region
        $region93: #{tpu_custom_call.1} parent=87 // pred_check
          %p1725 = pneg %p260
        $region94: #{tpu_custom_call.1} parent=87 // pred_check_branch
          %1727 = sbr.rel (%p1725) target = $region96
        $region95: #{tpu_custom_call.1} parent=87 // pred_region
          %s1728 = sand.u32 %s245, 1
          %s1729 = scalar_lea.sflag [#allocation20], %s1728
          %s1730 = sand.u32 %s245, 1
          %s1731 = smul.addr %s1730, 64
          %s1732 = scalar_lea.vmem [#allocation19], %s1731
          %1733 = dma.done %s1729, 1024
        $region96: #{tpu_custom_call.1} parent=87 // pred_fallthru
          _
      $region88: #{tpu_custom_call.1} parent=5 // pred_fallthru
        _
    $region6: #{tpu_custom_call.1} parent=1 // loop_footer
      %s33 = sadd.s32 1, %s29
    $region7: #{tpu_custom_call.1} parent=1 // loop_footer_branch
      %28 = sbr.rel target = $region3
    $region8: #{tpu_custom_call.1} parent=1 // loop_exit
      _
    %1734 = vsyncpa [#allocation8], 1
    %s1735 = scalar_lea.sflag [#allocation8], 1
    %1736 = vsyncpa %s1735, 1
    %1737 = vsyncpa [#allocation11], 1
    %s1738 = scalar_lea.sflag [#allocation11], 1
    %1739 = vsyncpa %s1738, 1
    %1740 = vsyncpa [#allocation14], 1
    %1741 = vsyncpa [#allocation17], 1
    %1742 = vsyncpa [#allocation9], 1
    %s1743 = scalar_lea.sflag [#allocation9], 1
    %1744 = vsyncpa %s1743, 1
    %1745 = vsyncpa [#allocation20], 1
    %s1746 = scalar_lea.sflag [#allocation20], 1
    %1747 = vsyncpa %s1746, 1

</llo_original>
